<compile_context>
chip_gen: v7x
topology: tpu7x:2x2x1
jax: 0.10.0
libtpu: 0.0.40
codegen_flags: <defaults>
</compile_context>

<pallas_src>
import jax
import jax.numpy as jnp
from jax.experimental import pallas as pl
from jax.experimental.pallas import tpu as pltpu


def _round_up(x: int, m: int) -> int:
    return ((x + m - 1) // m) * m


def _make_matmul_kernel(n_k_steps: int, k_rem: int, precision):
    """Builds the kernel body; closes over static K-tail size and precision."""

    def kernel(a_ref, b_ref, o_ref):
        k = pl.program_id(2)

        # Zero the K-resident f32 output block on the first K step, then
        # accumulate directly into it (no separate scratch accumulator).
        @pl.when(k == 0)
        def _zero():
            o_ref[...] = jnp.zeros_like(o_ref)

        def _acc(a, b):
            o_ref[...] += jnp.dot(
                a, b, preferred_element_type=jnp.float32, precision=precision)

        if k_rem == 0:
            _acc(a_ref[...], b_ref[...])
        else:
            # K does not divide tk: the DMA for the last K block only fills
            # the first k_rem columns/rows of the VMEM buffers; the tail is
            # stale garbage.  Mask it to zero in-kernel (cheap VPU select on
            # exactly one K step) instead of padding A/B in HBM.
            @pl.when(k != n_k_steps - 1)
            def _full():
                _acc(a_ref[...], b_ref[...])

            @pl.when(k == n_k_steps - 1)
            def _tail():
                a = a_ref[...]
                b = b_ref[...]
                a_keep = jax.lax.broadcasted_iota(jnp.int32, a.shape, 1) < k_rem
                b_keep = jax.lax.broadcasted_iota(jnp.int32, b.shape, 0) < k_rem
                _acc(jnp.where(a_keep, a, 0.0), jnp.where(b_keep, b, 0.0))

    return kernel


def matmul(a: jax.Array, b: jax.Array, *,
           precision=jax.lax.Precision.HIGHEST) -> jax.Array:
    """C = A @ B with A:(M,K), B:(K,N) -> C:(M,N), float32 accumulation."""
    assert a.ndim == 2 and b.ndim == 2, "matmul expects 2-D operands"
    M, K = a.shape
    Kb, N = b.shape
    assert K == Kb, f"inner dims mismatch: {K} vs {Kb}"

    a = a.astype(jnp.float32)
    b = b.astype(jnp.float32)

    if K == 0:
        return jnp.zeros((M, N), jnp.float32)

    # ---- Base tiles per chip generation ------------------------------------
    # v4/v5/v6 have 128 MiB physical VMEM -> large resident C tiles.
    # v7x (and unknown chips) have 64 MiB -> keep footprint well below 48 MiB.
    try:
        kind = jax.devices()[0].device_kind.lower()
    except Exception:  # pragma: no cover - defensive
        kind = ""
    big_vmem = any(t in kind for t in ("v4", "v5", "v6"))
    if big_vmem:
        tm, tn, tk = 2048, 2048, 512
        vmem_cap = 96 << 20
    else:
        tm, tn, tk = 1024, 1024, 512
        vmem_cap = 48 << 20

    # ---- Lane-align small misaligned N --------------------------------------
    # If N is smaller than the default tile and not a multiple of 128, every
    # output store would be a masked (non-lane-dense) vst.msk.  Pad B's
    # columns to the next 128 multiple (trivial HBM cost at these sizes) and
    # slice the result.  Large misaligned N only masks the tail tile column.
    if N % 128 != 0 and N < tn:
        Np = _round_up(N, 128)
        b_in = jnp.pad(b, ((0, 0), (0, Np - N)))
    else:
        Np, b_in = N, b

    # ---- Clamp tiles to the problem ------------------------------------------
    tm = min(tm, M)
    tn = min(tn, Np)   # whenever tn < default it is a multiple of 128 (above)
    tk = min(tk, K)

    # ---- Megacore balance -----------------------------------------------------
    # (i, j) grid axes are "parallel" and split across TensorCores.  A single
    # tile (or a small odd count) leaves one core idle; split a tile to make
    # the parallel count even (>= 2).
    def par_tiles(tm_, tn_):
        return pl.cdiv(M, tm_) * pl.cdiv(Np, tn_)

    pt = par_tiles(tm, tn)
    if pt % 2 == 1 and pt < 8:
        tn_half = _round_up(pl.cdiv(tn, 2), 128)
        tm_half = _round_up(pl.cdiv(tm, 2), 8)
        if tn > 128 and par_tiles(tm, tn_half) % 2 == 0:
            tn = tn_half
        elif tm > 8 and par_tiles(tm_half, tn) % 2 == 0:
            tm = tm_half
        elif pt == 1:
            if tn > 128:
                tn = tn_half
            elif tm > 8:
                tm = tm_half

    n_k = pl.cdiv(K, tk)
    k_rem = K % tk                       # 0 when tk divides K (incl. tk == K)
    grid = (pl.cdiv(M, tm), pl.cdiv(Np, tn), n_k)

    # ---- VMEM budget: double-buffered A/B/C tiles + headroom ------------------
    itemsize = 4
    vmem_need = 2 * itemsize * (tm * tk + tk * tn + tm * tn)
    vmem_limit = int(min(vmem_cap, max(32 << 20, vmem_need + (8 << 20))))

    # Advisory cost estimate (accounts for the multi-pass f32 MXU algorithm).
    passes = {jax.lax.Precision.HIGHEST: 6,
              jax.lax.Precision.HIGH: 3}.get(precision, 1)
    cost = pl.CostEstimate(
        flops=2 * M * Np * K * passes,
        bytes_accessed=itemsize * (M * K + K * Np + M * Np),
        transcendentals=0,
    )

    # TODO(synk): if DMA is still exposed on v6e after the tile rebalance,
    # add pipeline_mode=pl.Buffered(3) to the A/B in_specs.
    out = pl.pallas_call(
        _make_matmul_kernel(n_k, k_rem, precision),
        out_shape=jax.ShapeDtypeStruct((M, Np), jnp.float32),
        grid_spec=pltpu.PrefetchScalarGridSpec(
            num_scalar_prefetch=0,
            grid=grid,
            in_specs=[
                pl.BlockSpec((tm, tk), lambda i, j, k: (i, k)),
                pl.BlockSpec((tk, tn), lambda i, j, k: (k, j)),
            ],
            out_specs=pl.BlockSpec((tm, tn), lambda i, j, k: (i, j)),
        ),
        compiler_params=pltpu.CompilerParams(
            dimension_semantics=("parallel", "parallel", "arbitrary"),
            vmem_limit_bytes=vmem_limit,
        ),
        cost_estimate=cost,
    )(a, b_in)

    return out if Np == N else out[:, :N]


if __name__ == "__main__":
    key = jax.random.PRNGKey(0)
    ka, kb, kc, kd, ke, kf = jax.random.split(key, 6)
    hp = jax.lax.Precision.HIGHEST

    # 1) Aligned small shapes.
    M, K, N = 128, 64, 256
    A = jax.random.normal(ka, (M, K), dtype=jnp.float32)
    B = jax.random.normal(kb, (K, N), dtype=jnp.float32)
    C = jax.block_until_ready(matmul(A, B))
    assert C.shape == (M, N)
    assert jnp.allclose(C, jnp.dot(A, B, precision=hp), atol=2e-3, rtol=2e-3), \
        "aligned matmul mismatch"

    # 2) Unaligned M/N: exercises the lane-padding (Np) and full-dim-block paths.
    Mu, Ku, Nu = 100, 96, 200
    A2 = jax.random.normal(kc, (Mu, Ku), dtype=jnp.float32)
    B2 = jax.random.normal(kd, (Ku, Nu), dtype=jnp.float32)
    C2 = jax.block_until_ready(matmul(A2, B2))
    assert C2.shape == (Mu, Nu)
    assert jnp.allclose(C2, jnp.dot(A2, B2, precision=hp), atol=2e-3, rtol=2e-3), \
        "unaligned matmul mismatch"

    # 3) K remainder: K > tk with K % tk != 0 -> in-kernel tail masking path.
    Mr, Kr, Nr = 64, 600, 256
    A3 = jax.random.normal(ke, (Mr, Kr), dtype=jnp.float32)
    B3 = jax.random.normal(kf, (Kr, Nr), dtype=jnp.float32)
    C3 = jax.block_until_ready(matmul(A3, B3))
    assert C3.shape == (Mr, Nr)
    assert jnp.allclose(C3, jnp.dot(A3, B3, precision=hp), atol=2e-3, rtol=2e-3), \
        "K-remainder matmul mismatch"

    print("KERNEL_OK")
</pallas_src>

<mosaic_0001>
module attributes {stable_mosaic.version = 11 : i64} {
  func.func @kernel(%arg0: i32, %arg1: i32, %arg2: i32, %arg3: memref<128x64xf32, #tpu.memory_space<vmem>>, %arg4: memref<64x128xf32, #tpu.memory_space<vmem>>, %arg5: memref<128x128xf32, #tpu.memory_space<vmem>>) attributes {dimension_semantics = [#tpu.dimension_semantics<parallel>, #tpu.dimension_semantics<parallel>, #tpu.dimension_semantics<arbitrary>], iteration_bounds = array<i64: 1, 2, 1>, scalar_prefetch = 0 : i64, scratch_operands = 0 : i64, tpu.core_type = #tpu.core_type<tc>, window_params = [{transform_indices = @transform_0, window_bounds = array<i64: 128, 64>}, {transform_indices = @transform_1, window_bounds = array<i64: 64, 128>}, {transform_indices = @transform_2, window_bounds = array<i64: 128, 128>}]} {
    %c0_i32 = arith.constant 0 : i32
    %0 = arith.cmpi eq, %arg2, %c0_i32 : i32
    %1 = arith.extui %0 : i1 to i32
    %c0_i32_0 = arith.constant 0 : i32
    %2 = arith.cmpi ne, %1, %c0_i32_0 : i32
    scf.if %2 {
      %cst_8 = arith.constant 0.000000e+00 : f32
      %9 = vector.broadcast %cst_8 : f32 to vector<128x128xf32>
      %c0_9 = arith.constant 0 : index
      %c0_10 = arith.constant 0 : index
      %10 = vector.load %arg5[%c0_9, %c0_10] : memref<128x128xf32, #tpu.memory_space<vmem>>, vector<128x128xf32>
      tpu.vector_store %arg5[%c0_9, %c0_10], %9 {strides = array<i32>} : memref<128x128xf32, #tpu.memory_space<vmem>>, vector<128x128xf32>,
    } else {
    }
    %c0 = arith.constant 0 : index
    %c0_1 = arith.constant 0 : index
    %3 = vector.load %arg3[%c0, %c0_1] : memref<128x64xf32, #tpu.memory_space<vmem>>, vector<128x64xf32>
    %c0_2 = arith.constant 0 : index
    %c0_3 = arith.constant 0 : index
    %4 = vector.load %arg4[%c0_2, %c0_3] : memref<64x128xf32, #tpu.memory_space<vmem>>, vector<64x128xf32>
    %c0_4 = arith.constant 0 : index
    %c0_5 = arith.constant 0 : index
    %5 = vector.load %arg5[%c0_4, %c0_5] : memref<128x128xf32, #tpu.memory_space<vmem>>, vector<128x128xf32>
    %cst = arith.constant dense<0.000000e+00> : vector<128x128xf32>
    %6 = tpu.matmul %3, %4, %cst {dimension_numbers = #tpu.dot_dimension_numbers<[1], [0], [0], [1], [0, 0, 1, 1], [], []>, precision = #tpu.contract_precision<fp32>} : vector<128x64xf32>, vector<64x128xf32>, vector<128x128xf32> -> vector<128x128xf32>
    %7 = arith.addf %5, %6 : vector<128x128xf32>
    %c0_6 = arith.constant 0 : index
    %c0_7 = arith.constant 0 : index
    %8 = vector.load %arg5[%c0_6, %c0_7] : memref<128x128xf32, #tpu.memory_space<vmem>>, vector<128x128xf32>
    tpu.vector_store %arg5[%c0_6, %c0_7], %7 {strides = array<i32>} : memref<128x128xf32, #tpu.memory_space<vmem>>, vector<128x128xf32>,
    return
  }
  func.func @transform_0(%arg0: i32, %arg1: i32, %arg2: i32) -> (i32, i32) {
    %c0_i32 = arith.constant 0 : i32
    return %arg0, %arg2 : i32, i32
  }
  func.func @transform_1(%arg0: i32, %arg1: i32, %arg2: i32) -> (i32, i32) {
    %c0_i32 = arith.constant 0 : i32
    return %arg2, %arg1 : i32, i32
  }
  func.func @transform_2(%arg0: i32, %arg1: i32, %arg2: i32) -> (i32, i32) {
    %c0_i32 = arith.constant 0 : i32
    return %arg0, %arg1 : i32, i32
  }
}

</mosaic_0001>

<llo_original>
// kernel: tpu_custom_call.1
$region0: #{tpu_custom_call.1}
  #allocation0 [shape = 'u32[]', space=smem, size = 0x4, offset = 0x4, fixed_abs, tag = 'smem constant byte address 0x4 - core index']
  #allocation1 [shape = 'u32[144,128]{1,0:T(1,128)}', space=vmem, size = 0x12000, scoped, tag = 'internal scratch']
  %s0 = inlined_call_operand.vmem [shape: f32[128,64], index: 0, kind: input, shape index: {}]
  %s1 = inlined_call_operand.vmem [shape: f32[64,256], index: 1, kind: input, shape index: {}]
  %s2 = inlined_call_operand.hbm [shape: f32[128,256], index: 2, kind: output, shape index: {}]
  %s3 = sld [smem:[#allocation0]]
  $region83: #{tpu_custom_call.1} parent=0
    _
  %s5 = ssub.s32 1, %s3
  %s6 = scalar_select 0, %s5, %s3
  $region1: #{tpu_custom_call.1} parent=0
    #allocation2 [shape = 'u8[65536]{0}', space=vmem, size = 0x10000, scoped, tag = 'input window, operand 1']
    #allocation3 [shape = 'u8[131072]{0}', space=vmem, size = 0x20000, scoped, tag = 'output window, operand 0']
    #allocation4 [shape = 's32[2]{0}', space=sflag, size = 0x8, scoped, tag = 'scoped memory for tpu_custom_call.1']
    %7 = vsyncpa [#allocation4], 0
    %s8 = scalar_lea.sflag [#allocation4], 1
    %9 = vsyncpa %s8, 0
    loop: start=0, step=1, limit=4
    $region2: #{tpu_custom_call.1} parent=1 // loop_pre_header
      _
    $region3: #{tpu_custom_call.1} parent=1 // loop_header
      %s11 = sphi 0, %s15
      %p12 = scmp.ge.s32.totalorder %s11, 4
      %s18 = sphi 0, %s37
      %s19 = sphi 0, %s33
      %s20 = sphi 0, %s29
      %s21 = sphi 0, %s18
      %s22 = sphi 0, %s19
      %s23 = sphi 0, %s20
      %s24 = sphi 0, %s21
      %s25 = sphi 0, %s22
      %s26 = sphi 0, %s23
      %s42 = sphi 0, %s44
      %s45 = sphi 0, %s42
      %s46 = sphi 0, %s45
      %s62 = sphi 0, %s46
      %s70 = sphi 0, %s72
      %s73 = sphi 0, %s70
      %s74 = sphi 0, %s73
      %s90 = sphi 0, %s74
      %s98 = sphi 0, %s100
      %s101 = sphi 0, %s98
      %s102 = sphi 0, %s101
      %s118 = sphi 0, %s102
    $region4: #{tpu_custom_call.1} parent=1 // loop_header_branch
      %14 = sbr.rel (%p12) target = $region8
    $region5: #{tpu_custom_call.1} parent=1 // loop_body
      %s16 = ssub.s32 %s11, 1
      %s17 = ssub.s32 %s11, 2
      %s27 = sadd.s32 1, %s20
      %p28 = scmp.ge.s32.totalorder %s27, 1
      %s29 = scalar_select %p28, 0, %s27
      %s30 = sadd.s32 1, %s19
      %s31 = scalar_select %p28, %s30, %s19
      %p32 = scmp.ge.s32.totalorder %s31, 2
      %s33 = scalar_select %p32, 0, %s31
      %s34 = sadd.s32 1, %s18
      %s35 = scalar_select %p32, %s34, %s18
      %p36 = scmp.ge.s32.totalorder %s35, 1
      %s37 = scalar_select %p36, 0, %s35
      %s38 = ssub.s32 %s18, %s37
      %s39 = ssub.s32 %s20, %s29
      %s40 = sor.u32 %s38, %s39
      %p41 = scmp.eq.s32.totalorder %s40, 0
      %s43 = sadd.s32 %s42, 1
      %s44 = scalar_select %p41, %s42, %s43
      %p47 = pneg %p41
      %p48 = scmp.eq.s32.totalorder %s11, 1
      %p49 = por %p47, %p48
      %p50 = scmp.ne.s32.totalorder %s42, %s45
      %p51 = scmp.eq.s32.totalorder %s11, 0
      %p52 = por %p50, %p51
      %p53 = scmp.ne.s32.totalorder %s42, %s45
      %p54 = scmp.eq.s32.totalorder %s16, 1
      %p55 = por %p53, %p54
      %p56 = scmp.ne.s32.totalorder %s45, %s46
      %p57 = scmp.eq.s32.totalorder %s16, 0
      %p58 = por %p56, %p57
      %p59 = scmp.ne.s32.totalorder %s45, %s46
      %p60 = scmp.eq.s32.totalorder %s17, 1
      %p61 = por %p59, %p60
      %p63 = scmp.ne.s32.totalorder %s46, %s62
      %p64 = scmp.eq.s32.totalorder %s17, 0
      %p65 = por %p63, %p64
      %s66 = ssub.s32 %s20, %s29
      %s67 = ssub.s32 %s19, %s33
      %s68 = sor.u32 %s66, %s67
      %p69 = scmp.eq.s32.totalorder %s68, 0
      %s71 = sadd.s32 %s70, 1
      %s72 = scalar_select %p69, %s70, %s71
      %p75 = pneg %p69
      %p76 = scmp.eq.s32.totalorder %s11, 1
      %p77 = por %p75, %p76
      %p78 = scmp.ne.s32.totalorder %s70, %s73
      %p79 = scmp.eq.s32.totalorder %s11, 0
      %p80 = por %p78, %p79
      %p81 = scmp.ne.s32.totalorder %s70, %s73
      %p82 = scmp.eq.s32.totalorder %s16, 1
      %p83 = por %p81, %p82
      %p84 = scmp.ne.s32.totalorder %s73, %s74
      %p85 = scmp.eq.s32.totalorder %s16, 0
      %p86 = por %p84, %p85
      %p87 = scmp.ne.s32.totalorder %s73, %s74
      %p88 = scmp.eq.s32.totalorder %s17, 1
      %p89 = por %p87, %p88
      %p91 = scmp.ne.s32.totalorder %s74, %s90
      %p92 = scmp.eq.s32.totalorder %s17, 0
      %p93 = por %p91, %p92
      %s94 = ssub.s32 %s18, %s37
      %s95 = ssub.s32 %s19, %s33
      %s96 = sor.u32 %s94, %s95
      %p97 = scmp.eq.s32.totalorder %s96, 0
      %s99 = sadd.s32 %s98, 1
      %s100 = scalar_select %p97, %s98, %s99
      %p103 = pneg %p97
      %p104 = scmp.eq.s32.totalorder %s11, 1
      %p105 = por %p103, %p104
      %p106 = scmp.ne.s32.totalorder %s98, %s101
      %p107 = scmp.eq.s32.totalorder %s11, 0
      %p108 = por %p106, %p107
      %p109 = scmp.ne.s32.totalorder %s98, %s101
      %p110 = scmp.eq.s32.totalorder %s16, 1
      %p111 = por %p109, %p110
      %p112 = scmp.ne.s32.totalorder %s101, %s102
      %p113 = scmp.eq.s32.totalorder %s16, 0
      %p114 = por %p112, %p113
      %p115 = scmp.ne.s32.totalorder %s101, %s102
      %p116 = scmp.eq.s32.totalorder %s17, 1
      %p117 = por %p115, %p116
      %p119 = scmp.ne.s32.totalorder %s102, %s118
      %p120 = scmp.eq.s32.totalorder %s17, 0
      %p121 = por %p119, %p120
      %p122 = scmp.le.s32.totalorder 1, %s11
      %p123 = scmp.lt.s32.totalorder %s11, 3
      %p124 = pnand %p122, %p123
      %p125 = pneg %p124
      // Predicated region
      $region9: #{tpu_custom_call.1} parent=5 // pred_check
        _
      $region10: #{tpu_custom_call.1} parent=5 // pred_check_branch
        %127 = sbr.rel (%p124) target = $region12
      $region11: #{tpu_custom_call.1} parent=5 // pred_region
        %s128 = ssub.s32 %s11, 1
        // Predicated region
        $region13: #{tpu_custom_call.1} parent=11 // pred_check
          %p129 = pneg %p58
        $region14: #{tpu_custom_call.1} parent=11 // pred_check_branch
          %131 = sbr.rel (%p129) target = $region16
        $region15: #{tpu_custom_call.1} parent=11 // pred_region
          %s132 = smul.u32 16, %s21
          %p133 = scmp.lt.s32.totalorder %s132, 15
          %s134 = scalar_select %p133, %s132, 15
          %p135 = scmp.lt.s32.totalorder %s23, 0
          %s136 = scalar_select %p135, %s23, 0
          %s137 = sadd.s32 %s136, %s134
          %s138 = smul.addr %s137, 8
          %s139 = scalar_lea.vmem %s0, %s138
          %s140 = smul.u32 16, %s21
        $region16: #{tpu_custom_call.1} parent=11 // pred_fallthru
          _
      $region12: #{tpu_custom_call.1} parent=5 // pred_fallthru
        _
      %p141 = scmp.lt.s32.totalorder %s11, 2
      // Predicated region
      $region17: #{tpu_custom_call.1} parent=5 // pred_check
        %p142 = pneg %p141
      $region18: #{tpu_custom_call.1} parent=5 // pred_check_branch
        %144 = sbr.rel (%p142) target = $region20
      $region19: #{tpu_custom_call.1} parent=5 // pred_region
        // Predicated region
        $region21: #{tpu_custom_call.1} parent=19 // pred_check
          %p145 = pneg %p80
        $region22: #{tpu_custom_call.1} parent=19 // pred_check_branch
          %147 = sbr.rel (%p145) target = $region24
        $region23: #{tpu_custom_call.1} parent=19 // pred_region
          %s148 = sand.u32 %s70, 1
          %s149 = sand.u32 %s70, 1
          %s150 = smul.addr %s149, 64
          %s151 = scalar_lea.vmem [#allocation2], %s150
          %s152 = smul.u32 8, %s20
          %s153 = smul.addr %s152, 2
          %s154 = sadd.s32 %s19, %s153
          %s155 = smul.addr %s154, 8
          %s156 = scalar_lea.vmem %s1, %s155
          // Predicated region
          $region25: #{tpu_custom_call.1} parent=23 // pred_check
            _
          $region26: #{tpu_custom_call.1} parent=23 // pred_check_branch
            %158 = sbr.rel (0) target = $region28
          $region27: #{tpu_custom_call.1} parent=23 // pred_region
            // Predicated region
            $region29: #{tpu_custom_call.1} parent=27 // pred_check
              _
            $region30: #{tpu_custom_call.1} parent=27 // pred_check_branch
              %160 = sbr.rel (0) target = $region32
            $region31: #{tpu_custom_call.1} parent=27 // pred_region
              // Predicated region
              $region44: #{tpu_custom_call.1} parent=31 // pred_check
                _
              $region45: #{tpu_custom_call.1} parent=31 // pred_check_branch
                %189 = sbr.rel (0) target = $region47
              $region46: #{tpu_custom_call.1} parent=31 // pred_region
                loop: start=0, step=1, limit=1
                $region48: #{tpu_custom_call.1} parent=46 // loop_pre_header
                  _
                $region49: #{tpu_custom_call.1} parent=46 // loop_header
                  %s191 = sphi 0, %s195
                  %p192 = scmp.ge.s32.totalorder %s191, 1
                  %s196 = sphi %s156, %s156
                  %s197 = sphi %s151, %s151
                $region50: #{tpu_custom_call.1} parent=46 // loop_header_branch
                  %194 = sbr.rel (%p192) target = $region54
                $region51: #{tpu_custom_call.1} parent=46 // loop_body
                  %v198 = vld [vmem:[%s196] sm:$0xff]
                  %199 = vst [vmem:[%s197] sm:$0xff] %v198
                  %v200 = vld [vmem:[%s196 + $0x10] sm:$0xff]
                  %201 = vst [vmem:[%s197 + $0x8] sm:$0xff] %v200
                  %v202 = vld [vmem:[%s196 + $0x20] sm:$0xff]
                  %203 = vst [vmem:[%s197 + $0x10] sm:$0xff] %v202
                  %v204 = vld [vmem:[%s196 + $0x30] sm:$0xff]
                  %205 = vst [vmem:[%s197 + $0x18] sm:$0xff] %v204
                  %v206 = vld [vmem:[%s196 + $0x40] sm:$0xff]
                  %207 = vst [vmem:[%s197 + $0x20] sm:$0xff] %v206
                  %v208 = vld [vmem:[%s196 + $0x50] sm:$0xff]
                  %209 = vst [vmem:[%s197 + $0x28] sm:$0xff] %v208
                  %v210 = vld [vmem:[%s196 + $0x60] sm:$0xff]
                  %211 = vst [vmem:[%s197 + $0x30] sm:$0xff] %v210
                  %v212 = vld [vmem:[%s196 + $0x70] sm:$0xff]
                  %213 = vst [vmem:[%s197 + $0x38] sm:$0xff] %v212
                $region52: #{tpu_custom_call.1} parent=46 // loop_footer
                  %s195 = sadd.s32 1, %s191
                $region53: #{tpu_custom_call.1} parent=46 // loop_footer_branch
                  %190 = sbr.rel target = $region49
                $region54: #{tpu_custom_call.1} parent=46 // loop_exit
                  _
              $region47: #{tpu_custom_call.1} parent=31 // pred_fallthru
                _
              // Predicated region
              $region55: #{tpu_custom_call.1} parent=31 // pred_check
                _
              $region56: #{tpu_custom_call.1} parent=31 // pred_check_branch
                %215 = sbr.rel target = $region58
              $region57: #{tpu_custom_call.1} parent=31 // pred_region
                _
              $region58: #{tpu_custom_call.1} parent=31 // pred_fallthru
                _
            $region32: #{tpu_custom_call.1} parent=27 // pred_fallthru
              _
            // Predicated region
            $region33: #{tpu_custom_call.1} parent=27 // pred_check
              _
            $region34: #{tpu_custom_call.1} parent=27 // pred_check_branch
              %162 = sbr.rel target = $region36
            $region35: #{tpu_custom_call.1} parent=27 // pred_region
              loop: start=0, step=1, limit=1
              $region37: #{tpu_custom_call.1} parent=35 // loop_pre_header
                _
              $region38: #{tpu_custom_call.1} parent=35 // loop_header
                %s165 = sphi 0, %s169
                %p166 = scmp.ge.s32.totalorder %s165, 1
                %s170 = sphi %s156, %s156
                %s171 = sphi %s151, %s151
              $region39: #{tpu_custom_call.1} parent=35 // loop_header_branch
                %168 = sbr.rel (%p166) target = $region43
              $region40: #{tpu_custom_call.1} parent=35 // loop_body
                %v172 = vld [vmem:[%s170] sm:$0xff]
                %173 = vst [vmem:[%s171] sm:$0xff] %v172
                %v174 = vld [vmem:[%s170 + $0x10] sm:$0xff]
                %175 = vst [vmem:[%s171 + $0x8] sm:$0xff] %v174
                %v176 = vld [vmem:[%s170 + $0x20] sm:$0xff]
                %177 = vst [vmem:[%s171 + $0x10] sm:$0xff] %v176
                %v178 = vld [vmem:[%s170 + $0x30] sm:$0xff]
                %179 = vst [vmem:[%s171 + $0x18] sm:$0xff] %v178
                %v180 = vld [vmem:[%s170 + $0x40] sm:$0xff]
                %181 = vst [vmem:[%s171 + $0x20] sm:$0xff] %v180
                %v182 = vld [vmem:[%s170 + $0x50] sm:$0xff]
                %183 = vst [vmem:[%s171 + $0x28] sm:$0xff] %v182
                %v184 = vld [vmem:[%s170 + $0x60] sm:$0xff]
                %185 = vst [vmem:[%s171 + $0x30] sm:$0xff] %v184
                %v186 = vld [vmem:[%s170 + $0x70] sm:$0xff]
                %187 = vst [vmem:[%s171 + $0x38] sm:$0xff] %v186
              $region41: #{tpu_custom_call.1} parent=35 // loop_footer
                %s169 = sadd.s32 1, %s165
              $region42: #{tpu_custom_call.1} parent=35 // loop_footer_branch
                %164 = sbr.rel target = $region38
              $region43: #{tpu_custom_call.1} parent=35 // loop_exit
                _
            $region36: #{tpu_custom_call.1} parent=27 // pred_fallthru
              _
          $region28: #{tpu_custom_call.1} parent=23 // pred_fallthru
            _
          %216 = vnop
        $region24: #{tpu_custom_call.1} parent=19 // pred_fallthru
          _
      $region20: #{tpu_custom_call.1} parent=5 // pred_fallthru
        _
      %p217 = scmp.le.s32.totalorder 1, %s11
      %p218 = scmp.lt.s32.totalorder %s11, 3
      %p219 = pnand %p217, %p218
      %p220 = pneg %p219
      // Predicated region
      $region59: #{tpu_custom_call.1} parent=5 // pred_check
        _
      $region60: #{tpu_custom_call.1} parent=5 // pred_check_branch
        %222 = sbr.rel (%p219) target = $region62
      $region61: #{tpu_custom_call.1} parent=5 // pred_region
        %s223 = ssub.s32 %s11, 1
        %s224 = sand.u32 %s73, 1
        %s225 = sand.u32 %s73, 1
        %s226 = smul.addr %s225, 64
        %s227 = scalar_lea.vmem [#allocation2], %s226
        // Predicated region
        $region63: #{tpu_custom_call.1} parent=61 // pred_check
          %p228 = pneg %p86
        $region64: #{tpu_custom_call.1} parent=61 // pred_check_branch
          %230 = sbr.rel (%p228) target = $region66
        $region65: #{tpu_custom_call.1} parent=61 // pred_region
          _
        $region66: #{tpu_custom_call.1} parent=61 // pred_fallthru
          _
        %s231 = smul.u32 16, %s21
        %p232 = scmp.lt.s32.totalorder %s231, 15
        %s233 = scalar_select %p232, %s231, 15
        %p234 = scmp.lt.s32.totalorder %s23, 0
        %s235 = scalar_select %p234, %s23, 0
        %s236 = sadd.s32 %s235, %s233
        %s237 = smul.addr %s236, 8
        %s238 = scalar_lea.vmem %s0, %s237
        %p239 = pneg %p58
        %p240 = pneg %p55
        %s241 = sand.u32 %s73, 1
        %s242 = sand.u32 %s73, 1
        %s243 = smul.addr %s242, 64
        %s244 = scalar_lea.vmem [#allocation2], %s243
        %p245 = pneg %p86
        %p246 = pneg %p83
        %p247 = pneg %p114
        %p248 = pneg %p111
        %s249 = sand.u32 %s101, 1
        %s250 = scalar_lea.sflag [#allocation4], %s249
        %s251 = sand.u32 %s101, 1
        %s252 = smul.addr %s251, 128
        %s253 = scalar_lea.vmem [#allocation3], %s252
        %s254 = smul.u32 16, %s21
        %p255 = scmp.lt.s32.totalorder %s254, 15
        %s256 = scalar_select %p255, %s254, 15
        %p257 = scmp.lt.s32.totalorder %s23, 0
        %s258 = scalar_select %p257, %s23, 0
        %s259 = sadd.s32 %s258, %s256
        %s260 = smul.addr %s259, 8
        %s261 = scalar_lea.vmem %s0, %s260
        %s262 = smul.u32 16, %s21
        %s263 = smul.u32 8, %s23
        %s264 = smul.u32 16, %s21
        %p265 = scmp.eq.s32.totalorder %s23, 0
        // Predicated region
        $region67: #{tpu_custom_call.1} parent=61 // pred_check
          %p266 = pneg %p265
        $region68: #{tpu_custom_call.1} parent=61 // pred_check_branch
          %268 = sbr.rel (%p266) target = $region70
        $region69: #{tpu_custom_call.1} parent=61 // pred_region
          %269 = vst [vmem:[%s253] sm:$0xff] 0.0
          %270 = vst [vmem:[%s253 + $0x8] sm:$0xff] 0.0
          %271 = vst [vmem:[%s253 + $0x10] sm:$0xff] 0.0
          %272 = vst [vmem:[%s253 + $0x18] sm:$0xff] 0.0
          %273 = vst [vmem:[%s253 + $0x20] sm:$0xff] 0.0
          %274 = vst [vmem:[%s253 + $0x28] sm:$0xff] 0.0
          %275 = vst [vmem:[%s253 + $0x30] sm:$0xff] 0.0
          %276 = vst [vmem:[%s253 + $0x38] sm:$0xff] 0.0
          %277 = vst [vmem:[%s253 + $0x40] sm:$0xff] 0.0
          %278 = vst [vmem:[%s253 + $0x48] sm:$0xff] 0.0
          %279 = vst [vmem:[%s253 + $0x50] sm:$0xff] 0.0
          %280 = vst [vmem:[%s253 + $0x58] sm:$0xff] 0.0
          %281 = vst [vmem:[%s253 + $0x60] sm:$0xff] 0.0
          %282 = vst [vmem:[%s253 + $0x68] sm:$0xff] 0.0
          %283 = vst [vmem:[%s253 + $0x70] sm:$0xff] 0.0
          %284 = vst [vmem:[%s253 + $0x78] sm:$0xff] 0.0
        $region70: #{tpu_custom_call.1} parent=61 // pred_fallthru
          _
        %v285 = vld [vmem:[%s261] sm:$0xff]
        %v286 = vld [vmem:[%s261 + $0x8] sm:$0xff]
        %v287 = vld [vmem:[%s261 + $0x10] sm:$0xff]
        %v288 = vld [vmem:[%s261 + $0x18] sm:$0xff]
        %v289 = vld [vmem:[%s261 + $0x20] sm:$0xff]
        %v290 = vld [vmem:[%s261 + $0x28] sm:$0xff]
        %v291 = vld [vmem:[%s261 + $0x30] sm:$0xff]
        %v292 = vld [vmem:[%s261 + $0x38] sm:$0xff]
        %v293 = vld [vmem:[%s261 + $0x40] sm:$0xff]
        %v294 = vld [vmem:[%s261 + $0x48] sm:$0xff]
        %v295 = vld [vmem:[%s261 + $0x50] sm:$0xff]
        %v296 = vld [vmem:[%s261 + $0x58] sm:$0xff]
        %v297 = vld [vmem:[%s261 + $0x60] sm:$0xff]
        %v298 = vld [vmem:[%s261 + $0x68] sm:$0xff]
        %v299 = vld [vmem:[%s261 + $0x70] sm:$0xff]
        %v300 = vld [vmem:[%s261 + $0x78] sm:$0xff]
        %v301 = vld [vmem:[%s227] sm:$0xff]
        %v302 = vld [vmem:[%s227 + $0x8] sm:$0xff]
        %v303 = vld [vmem:[%s227 + $0x10] sm:$0xff]
        %v304 = vld [vmem:[%s227 + $0x18] sm:$0xff]
        %v305 = vld [vmem:[%s227 + $0x20] sm:$0xff]
        %v306 = vld [vmem:[%s227 + $0x28] sm:$0xff]
        %v307 = vld [vmem:[%s227 + $0x30] sm:$0xff]
        %v308 = vld [vmem:[%s227 + $0x38] sm:$0xff]
        %v309 = vld [vmem:[%s253] sm:$0xff]
        %v310 = vld [vmem:[%s253 + $0x8] sm:$0xff]
        %v311 = vld [vmem:[%s253 + $0x10] sm:$0xff]
        %v312 = vld [vmem:[%s253 + $0x18] sm:$0xff]
        %v313 = vld [vmem:[%s253 + $0x20] sm:$0xff]
        %v314 = vld [vmem:[%s253 + $0x28] sm:$0xff]
        %v315 = vld [vmem:[%s253 + $0x30] sm:$0xff]
        %v316 = vld [vmem:[%s253 + $0x38] sm:$0xff]
        %v317 = vld [vmem:[%s253 + $0x40] sm:$0xff]
        %v318 = vld [vmem:[%s253 + $0x48] sm:$0xff]
        %v319 = vld [vmem:[%s253 + $0x50] sm:$0xff]
        %v320 = vld [vmem:[%s253 + $0x58] sm:$0xff]
        %v321 = vld [vmem:[%s253 + $0x60] sm:$0xff]
        %v322 = vld [vmem:[%s253 + $0x68] sm:$0xff]
        %v323 = vld [vmem:[%s253 + $0x70] sm:$0xff]
        %v324 = vld [vmem:[%s253 + $0x78] sm:$0xff]
        %vm325 = vcmask 523264
        %v327 = vsel %vm325, %v285, 0
        %v330 = vsel %vm325, %v286, 0
        %v333 = vsel %vm325, %v287, 0
        %v336 = vsel %vm325, %v288, 0
        %v339 = vsel %vm325, %v289, 0
        %v342 = vsel %vm325, %v290, 0
        %v345 = vsel %vm325, %v291, 0
        %v348 = vsel %vm325, %v292, 0
        %v351 = vsel %vm325, %v293, 0
        %v354 = vsel %vm325, %v294, 0
        %v357 = vsel %vm325, %v295, 0
        %v360 = vsel %vm325, %v296, 0
        %v363 = vsel %vm325, %v297, 0
        %v366 = vsel %vm325, %v298, 0
        %v369 = vsel %vm325, %v299, 0
        %v372 = vsel %vm325, %v300, 0
        %374 = vmatprep.subr.mxu0 0.0
        %v375 = vand.u32 %v301, 4294901760
        %376 = vmatpush1.msra.mxu0 %v375
        %377 = vmatprep.subr.mxu0 0.0
        %v378 = vand.u32 %v302, 4294901760
        %379 = vmatpush1.msra.mxu0 %v378
        %380 = vmatprep.subr.mxu0 0.0
        %v381 = vand.u32 %v303, 4294901760
        %382 = vmatpush1.msra.mxu0 %v381
        %383 = vmatprep.subr.mxu0 0.0
        %v384 = vand.u32 %v304, 4294901760
        %385 = vmatpush1.msra.mxu0 %v384
        %386 = vmatprep.subr.mxu0 0.0
        %v387 = vand.u32 %v305, 4294901760
        %388 = vmatpush1.msra.mxu0 %v387
        %389 = vmatprep.subr.mxu0 0.0
        %v390 = vand.u32 %v306, 4294901760
        %391 = vmatpush1.msra.mxu0 %v390
        %392 = vmatprep.subr.mxu0 0.0
        %v393 = vand.u32 %v307, 4294901760
        %394 = vmatpush1.msra.mxu0 %v393
        %395 = vmatprep.subr.mxu0 0.0
        %v396 = vand.u32 %v308, 4294901760
        %397 = vmatpush1.msra.mxu0 %v396
        %398 = vmatprep.subr.mxu0 0.0
        %399 = vmatpush1.msra.mxu0 0.0
        %400 = vmatprep.subr.mxu0 0.0
        %401 = vmatpush1.msra.mxu0 0.0
        %402 = vmatprep.subr.mxu0 0.0
        %403 = vmatpush1.msra.mxu0 0.0
        %404 = vmatprep.subr.mxu0 0.0
        %405 = vmatpush1.msra.mxu0 0.0
        %406 = vmatprep.subr.mxu0 0.0
        %407 = vmatpush1.msra.mxu0 0.0
        %408 = vmatprep.subr.mxu0 0.0
        %409 = vmatpush1.msra.mxu0 0.0
        %410 = vmatprep.subr.mxu0 0.0
        %411 = vmatpush1.msra.mxu0 0.0
        %412 = vmatprep.subr.mxu0 0.0
        %413 = vmatpush1.msra.mxu0 0.0
        %414 = vmatprep.subr.mxu0 0.0
        %415 = vmatpush1.msra.mxu0 0.0
        %416 = vmatprep.subr.mxu0 0.0
        %417 = vmatpush1.msra.mxu0 0.0
        %418 = vmatprep.subr.mxu0 0.0
        %419 = vmatpush1.msra.mxu0 0.0
        %420 = vmatprep.subr.mxu0 0.0
        %421 = vmatpush1.msra.mxu0 0.0
        %422 = vmatprep.subr.mxu0 0.0
        %423 = vmatpush1.msra.mxu0 0.0
        %424 = vmatprep.subr.mxu0 0.0
        %425 = vmatpush1.msra.mxu0 0.0
        %426 = vmatprep.subr.mxu0 0.0
        %427 = vmatpush1.msra.mxu0 0.0
        %428 = vmatprep.subr.mxu0 0.0
        %429 = vmatpush1.msra.mxu0 0.0
        %430 = vmatprep.subr.mxu0 0.0
        %431 = vmatpush1.msra.mxu0 0.0
        %432 = vmatprep.subr.mxu0 0.0
        %433 = vmatpush1.msra.mxu0 0.0
        %434 = vmatprep.subr.mxu0 0.0
        %435 = vmatpush1.msra.mxu0 0.0
        %436 = vmatprep.subr.mxu0 0.0
        %437 = vmatpush1.msra.mxu0 0.0
        %438 = vmatprep.subr.mxu0 0.0
        %439 = vmatpush1.msra.mxu0 0.0
        %440 = vmatprep.subr.mxu0 0.0
        %441 = vmatpush1.msra.mxu0 0.0
        %442 = vmatprep.subr.mxu0 0.0
        %443 = vmatpush1.msra.mxu0 0.0
        %444 = vmatprep.subr.mxu0 0.0
        %445 = vmatpush1.msra.mxu0 0.0
        %446 = vmatprep.mubr.f32.mxu0 0.0
        %v447 = vand.u32 %v327, 4294901760
        %v448 = vsub.f32 %v327, %v447
        %v449 = vand.u32 %v448, 4294901760
        %v450 = vsub.f32 %v448, %v449
        %v451 = vand.u32 %v450, 4294901760
        %452 = vmatmul.mubr.f32.gmra.mrb[0].mxu0 %v451
        %v453 = vpop.f32.mrb[0].mxu0
        %v454 = vadd.f32 0.0, %v453
        %v455 = vpop.f32.mrb[0].mxu0
        %456 = vmatprep.mubr.f32.mxu0 0.0
        %v457 = vand.u32 %v330, 4294901760
        %v458 = vsub.f32 %v330, %v457
        %v459 = vand.u32 %v458, 4294901760
        %v460 = vsub.f32 %v458, %v459
        %v461 = vand.u32 %v460, 4294901760
        %462 = vmatmul.mubr.f32.gmra.mrb[0].mxu0 %v461
        %v463 = vpop.f32.mrb[0].mxu0
        %v464 = vadd.f32 0.0, %v463
        %v465 = vpop.f32.mrb[0].mxu0
        %466 = vmatprep.mubr.f32.mxu0 0.0
        %v467 = vand.u32 %v333, 4294901760
        %v468 = vsub.f32 %v333, %v467
        %v469 = vand.u32 %v468, 4294901760
        %v470 = vsub.f32 %v468, %v469
        %v471 = vand.u32 %v470, 4294901760
        %472 = vmatmul.mubr.f32.gmra.mrb[0].mxu0 %v471
        %v473 = vpop.f32.mrb[0].mxu0
        %v474 = vadd.f32 0.0, %v473
        %v475 = vpop.f32.mrb[0].mxu0
        %476 = vmatprep.mubr.f32.mxu0 0.0
        %v477 = vand.u32 %v336, 4294901760
        %v478 = vsub.f32 %v336, %v477
        %v479 = vand.u32 %v478, 4294901760
        %v480 = vsub.f32 %v478, %v479
        %v481 = vand.u32 %v480, 4294901760
        %482 = vmatmul.mubr.f32.gmra.mrb[0].mxu0 %v481
        %v483 = vpop.f32.mrb[0].mxu0
        %v484 = vadd.f32 0.0, %v483
        %v485 = vpop.f32.mrb[0].mxu0
        %486 = vmatprep.mubr.f32.mxu0 0.0
        %v487 = vand.u32 %v339, 4294901760
        %v488 = vsub.f32 %v339, %v487
        %v489 = vand.u32 %v488, 4294901760
        %v490 = vsub.f32 %v488, %v489
        %v491 = vand.u32 %v490, 4294901760
        %492 = vmatmul.mubr.f32.gmra.mrb[0].mxu0 %v491
        %v493 = vpop.f32.mrb[0].mxu0
        %v494 = vadd.f32 0.0, %v493
        %v495 = vpop.f32.mrb[0].mxu0
        %496 = vmatprep.mubr.f32.mxu0 0.0
        %v497 = vand.u32 %v342, 4294901760
        %v498 = vsub.f32 %v342, %v497
        %v499 = vand.u32 %v498, 4294901760
        %v500 = vsub.f32 %v498, %v499
        %v501 = vand.u32 %v500, 4294901760
        %502 = vmatmul.mubr.f32.gmra.mrb[0].mxu0 %v501
        %v503 = vpop.f32.mrb[0].mxu0
        %v504 = vadd.f32 0.0, %v503
        %v505 = vpop.f32.mrb[0].mxu0
        %506 = vmatprep.mubr.f32.mxu0 0.0
        %v507 = vand.u32 %v345, 4294901760
        %v508 = vsub.f32 %v345, %v507
        %v509 = vand.u32 %v508, 4294901760
        %v510 = vsub.f32 %v508, %v509
        %v511 = vand.u32 %v510, 4294901760
        %512 = vmatmul.mubr.f32.gmra.mrb[0].mxu0 %v511
        %v513 = vpop.f32.mrb[0].mxu0
        %v514 = vadd.f32 0.0, %v513
        %v515 = vpop.f32.mrb[0].mxu0
        %516 = vmatprep.mubr.f32.mxu0 0.0
        %v517 = vand.u32 %v348, 4294901760
        %v518 = vsub.f32 %v348, %v517
        %v519 = vand.u32 %v518, 4294901760
        %v520 = vsub.f32 %v518, %v519
        %v521 = vand.u32 %v520, 4294901760
        %522 = vmatmul.mubr.f32.gmra.mrb[0].mxu0 %v521
        %v523 = vpop.f32.mrb[0].mxu0
        %v524 = vadd.f32 0.0, %v523
        %v525 = vpop.f32.mrb[0].mxu0
        %526 = vmatprep.mubr.f32.mxu0 0.0
        %v527 = vand.u32 %v351, 4294901760
        %v528 = vsub.f32 %v351, %v527
        %v529 = vand.u32 %v528, 4294901760
        %v530 = vsub.f32 %v528, %v529
        %v531 = vand.u32 %v530, 4294901760
        %532 = vmatmul.mubr.f32.gmra.mrb[0].mxu0 %v531
        %v533 = vpop.f32.mrb[0].mxu0
        %v534 = vadd.f32 0.0, %v533
        %v535 = vpop.f32.mrb[0].mxu0
        %536 = vmatprep.mubr.f32.mxu0 0.0
        %v537 = vand.u32 %v354, 4294901760
        %v538 = vsub.f32 %v354, %v537
        %v539 = vand.u32 %v538, 4294901760
        %v540 = vsub.f32 %v538, %v539
        %v541 = vand.u32 %v540, 4294901760
        %542 = vmatmul.mubr.f32.gmra.mrb[0].mxu0 %v541
        %v543 = vpop.f32.mrb[0].mxu0
        %v544 = vadd.f32 0.0, %v543
        %v545 = vpop.f32.mrb[0].mxu0
        %546 = vmatprep.mubr.f32.mxu0 0.0
        %v547 = vand.u32 %v357, 4294901760
        %v548 = vsub.f32 %v357, %v547
        %v549 = vand.u32 %v548, 4294901760
        %v550 = vsub.f32 %v548, %v549
        %v551 = vand.u32 %v550, 4294901760
        %552 = vmatmul.mubr.f32.gmra.mrb[0].mxu0 %v551
        %v553 = vpop.f32.mrb[0].mxu0
        %v554 = vadd.f32 0.0, %v553
        %v555 = vpop.f32.mrb[0].mxu0
        %556 = vmatprep.mubr.f32.mxu0 0.0
        %v557 = vand.u32 %v360, 4294901760
        %v558 = vsub.f32 %v360, %v557
        %v559 = vand.u32 %v558, 4294901760
        %v560 = vsub.f32 %v558, %v559
        %v561 = vand.u32 %v560, 4294901760
        %562 = vmatmul.mubr.f32.gmra.mrb[0].mxu0 %v561
        %v563 = vpop.f32.mrb[0].mxu0
        %v564 = vadd.f32 0.0, %v563
        %v565 = vpop.f32.mrb[0].mxu0
        %566 = vmatprep.mubr.f32.mxu0 0.0
        %v567 = vand.u32 %v363, 4294901760
        %v568 = vsub.f32 %v363, %v567
        %v569 = vand.u32 %v568, 4294901760
        %v570 = vsub.f32 %v568, %v569
        %v571 = vand.u32 %v570, 4294901760
        %572 = vmatmul.mubr.f32.gmra.mrb[0].mxu0 %v571
        %v573 = vpop.f32.mrb[0].mxu0
        %v574 = vadd.f32 0.0, %v573
        %v575 = vpop.f32.mrb[0].mxu0
        %576 = vmatprep.mubr.f32.mxu0 0.0
        %v577 = vand.u32 %v366, 4294901760
        %v578 = vsub.f32 %v366, %v577
        %v579 = vand.u32 %v578, 4294901760
        %v580 = vsub.f32 %v578, %v579
        %v581 = vand.u32 %v580, 4294901760
        %582 = vmatmul.mubr.f32.gmra.mrb[0].mxu0 %v581
        %v583 = vpop.f32.mrb[0].mxu0
        %v584 = vadd.f32 0.0, %v583
        %v585 = vpop.f32.mrb[0].mxu0
        %586 = vmatprep.mubr.f32.mxu0 0.0
        %v587 = vand.u32 %v369, 4294901760
        %v588 = vsub.f32 %v369, %v587
        %v589 = vand.u32 %v588, 4294901760
        %v590 = vsub.f32 %v588, %v589
        %v591 = vand.u32 %v590, 4294901760
        %592 = vmatmul.mubr.f32.gmra.mrb[0].mxu0 %v591
        %v593 = vpop.f32.mrb[0].mxu0
        %v594 = vadd.f32 0.0, %v593
        %v595 = vpop.f32.mrb[0].mxu0
        %596 = vmatprep.mubr.f32.mxu0 0.0
        %v597 = vand.u32 %v372, 4294901760
        %v598 = vsub.f32 %v372, %v597
        %v599 = vand.u32 %v598, 4294901760
        %v600 = vsub.f32 %v598, %v599
        %v601 = vand.u32 %v600, 4294901760
        %602 = vmatmul.mubr.f32.gmra.mrb[0].mxu0 %v601
        %v603 = vpop.f32.mrb[0].mxu0
        %v604 = vadd.f32 0.0, %v603
        %v605 = vpop.f32.mrb[0].mxu0
        %606 = vdwg.mxu0
        %607 = vmatprep.subr.mxu0 0.0
        %v608 = vand.u32 %v301, 4294901760
        %v609 = vsub.f32 %v301, %v608
        %v610 = vand.u32 %v609, 4294901760
        %v611 = vsub.f32 %v609, %v610
        %v612 = vand.u32 %v611, 4294901760
        %613 = vmatpush1.msra.mxu0 %v612
        %614 = vmatprep.subr.mxu0 0.0
        %v615 = vand.u32 %v302, 4294901760
        %v616 = vsub.f32 %v302, %v615
        %v617 = vand.u32 %v616, 4294901760
        %v618 = vsub.f32 %v616, %v617
        %v619 = vand.u32 %v618, 4294901760
        %620 = vmatpush1.msra.mxu0 %v619
        %621 = vmatprep.subr.mxu0 0.0
        %v622 = vand.u32 %v303, 4294901760
        %v623 = vsub.f32 %v303, %v622
        %v624 = vand.u32 %v623, 4294901760
        %v625 = vsub.f32 %v623, %v624
        %v626 = vand.u32 %v625, 4294901760
        %627 = vmatpush1.msra.mxu0 %v626
        %628 = vmatprep.subr.mxu0 0.0
        %v629 = vand.u32 %v304, 4294901760
        %v630 = vsub.f32 %v304, %v629
        %v631 = vand.u32 %v630, 4294901760
        %v632 = vsub.f32 %v630, %v631
        %v633 = vand.u32 %v632, 4294901760
        %634 = vmatpush1.msra.mxu0 %v633
        %635 = vmatprep.subr.mxu0 0.0
        %v636 = vand.u32 %v305, 4294901760
        %v637 = vsub.f32 %v305, %v636
        %v638 = vand.u32 %v637, 4294901760
        %v639 = vsub.f32 %v637, %v638
        %v640 = vand.u32 %v639, 4294901760
        %641 = vmatpush1.msra.mxu0 %v640
        %642 = vmatprep.subr.mxu0 0.0
        %v643 = vand.u32 %v306, 4294901760
        %v644 = vsub.f32 %v306, %v643
        %v645 = vand.u32 %v644, 4294901760
        %v646 = vsub.f32 %v644, %v645
        %v647 = vand.u32 %v646, 4294901760
        %648 = vmatpush1.msra.mxu0 %v647
        %649 = vmatprep.subr.mxu0 0.0
        %v650 = vand.u32 %v307, 4294901760
        %v651 = vsub.f32 %v307, %v650
        %v652 = vand.u32 %v651, 4294901760
        %v653 = vsub.f32 %v651, %v652
        %v654 = vand.u32 %v653, 4294901760
        %655 = vmatpush1.msra.mxu0 %v654
        %656 = vmatprep.subr.mxu0 0.0
        %v657 = vand.u32 %v308, 4294901760
        %v658 = vsub.f32 %v308, %v657
        %v659 = vand.u32 %v658, 4294901760
        %v660 = vsub.f32 %v658, %v659
        %v661 = vand.u32 %v660, 4294901760
        %662 = vmatpush1.msra.mxu0 %v661
        %663 = vmatprep.subr.mxu0 0.0
        %664 = vmatpush1.msra.mxu0 0.0
        %665 = vmatprep.subr.mxu0 0.0
        %666 = vmatpush1.msra.mxu0 0.0
        %667 = vmatprep.subr.mxu0 0.0
        %668 = vmatpush1.msra.mxu0 0.0
        %669 = vmatprep.subr.mxu0 0.0
        %670 = vmatpush1.msra.mxu0 0.0
        %671 = vmatprep.subr.mxu0 0.0
        %672 = vmatpush1.msra.mxu0 0.0
        %673 = vmatprep.subr.mxu0 0.0
        %674 = vmatpush1.msra.mxu0 0.0
        %675 = vmatprep.subr.mxu0 0.0
        %676 = vmatpush1.msra.mxu0 0.0
        %677 = vmatprep.subr.mxu0 0.0
        %678 = vmatpush1.msra.mxu0 0.0
        %679 = vmatprep.subr.mxu0 0.0
        %680 = vmatpush1.msra.mxu0 0.0
        %681 = vmatprep.subr.mxu0 0.0
        %682 = vmatpush1.msra.mxu0 0.0
        %683 = vmatprep.subr.mxu0 0.0
        %684 = vmatpush1.msra.mxu0 0.0
        %685 = vmatprep.subr.mxu0 0.0
        %686 = vmatpush1.msra.mxu0 0.0
        %687 = vmatprep.subr.mxu0 0.0
        %688 = vmatpush1.msra.mxu0 0.0
        %689 = vmatprep.subr.mxu0 0.0
        %690 = vmatpush1.msra.mxu0 0.0
        %691 = vmatprep.subr.mxu0 0.0
        %692 = vmatpush1.msra.mxu0 0.0
        %693 = vmatprep.subr.mxu0 0.0
        %694 = vmatpush1.msra.mxu0 0.0
        %695 = vmatprep.subr.mxu0 0.0
        %696 = vmatpush1.msra.mxu0 0.0
        %697 = vmatprep.subr.mxu0 0.0
        %698 = vmatpush1.msra.mxu0 0.0
        %699 = vmatprep.subr.mxu0 0.0
        %700 = vmatpush1.msra.mxu0 0.0
        %701 = vmatprep.subr.mxu0 0.0
        %702 = vmatpush1.msra.mxu0 0.0
        %703 = vmatprep.subr.mxu0 0.0
        %704 = vmatpush1.msra.mxu0 0.0
        %705 = vmatprep.subr.mxu0 0.0
        %706 = vmatpush1.msra.mxu0 0.0
        %707 = vmatprep.subr.mxu0 0.0
        %708 = vmatpush1.msra.mxu0 0.0
        %709 = vmatprep.subr.mxu0 0.0
        %710 = vmatpush1.msra.mxu0 0.0
        %711 = vmatprep.mubr.f32.mxu0 0.0
        %v712 = vand.u32 %v327, 4294901760
        %713 = vmatmul.mubr.f32.gmra.mrb[0].mxu0 %v712
        %v714 = vpop.f32.mrb[0].mxu0
        %v715 = vadd.f32 %v454, %v714
        %v716 = vpop.f32.mrb[0].mxu0
        %717 = vmatprep.mubr.f32.mxu0 0.0
        %v718 = vand.u32 %v330, 4294901760
        %719 = vmatmul.mubr.f32.gmra.mrb[0].mxu0 %v718
        %v720 = vpop.f32.mrb[0].mxu0
        %v721 = vadd.f32 %v464, %v720
        %v722 = vpop.f32.mrb[0].mxu0
        %723 = vmatprep.mubr.f32.mxu0 0.0
        %v724 = vand.u32 %v333, 4294901760
        %725 = vmatmul.mubr.f32.gmra.mrb[0].mxu0 %v724
        %v726 = vpop.f32.mrb[0].mxu0
        %v727 = vadd.f32 %v474, %v726
        %v728 = vpop.f32.mrb[0].mxu0
        %729 = vmatprep.mubr.f32.mxu0 0.0
        %v730 = vand.u32 %v336, 4294901760
        %731 = vmatmul.mubr.f32.gmra.mrb[0].mxu0 %v730
        %v732 = vpop.f32.mrb[0].mxu0
        %v733 = vadd.f32 %v484, %v732
        %v734 = vpop.f32.mrb[0].mxu0
        %735 = vmatprep.mubr.f32.mxu0 0.0
        %v736 = vand.u32 %v339, 4294901760
        %737 = vmatmul.mubr.f32.gmra.mrb[0].mxu0 %v736
        %v738 = vpop.f32.mrb[0].mxu0
        %v739 = vadd.f32 %v494, %v738
        %v740 = vpop.f32.mrb[0].mxu0
        %741 = vmatprep.mubr.f32.mxu0 0.0
        %v742 = vand.u32 %v342, 4294901760
        %743 = vmatmul.mubr.f32.gmra.mrb[0].mxu0 %v742
        %v744 = vpop.f32.mrb[0].mxu0
        %v745 = vadd.f32 %v504, %v744
        %v746 = vpop.f32.mrb[0].mxu0
        %747 = vmatprep.mubr.f32.mxu0 0.0
        %v748 = vand.u32 %v345, 4294901760
        %749 = vmatmul.mubr.f32.gmra.mrb[0].mxu0 %v748
        %v750 = vpop.f32.mrb[0].mxu0
        %v751 = vadd.f32 %v514, %v750
        %v752 = vpop.f32.mrb[0].mxu0
        %753 = vmatprep.mubr.f32.mxu0 0.0
        %v754 = vand.u32 %v348, 4294901760
        %755 = vmatmul.mubr.f32.gmra.mrb[0].mxu0 %v754
        %v756 = vpop.f32.mrb[0].mxu0
        %v757 = vadd.f32 %v524, %v756
        %v758 = vpop.f32.mrb[0].mxu0
        %759 = vmatprep.mubr.f32.mxu0 0.0
        %v760 = vand.u32 %v351, 4294901760
        %761 = vmatmul.mubr.f32.gmra.mrb[0].mxu0 %v760
        %v762 = vpop.f32.mrb[0].mxu0
        %v763 = vadd.f32 %v534, %v762
        %v764 = vpop.f32.mrb[0].mxu0
        %765 = vmatprep.mubr.f32.mxu0 0.0
        %v766 = vand.u32 %v354, 4294901760
        %767 = vmatmul.mubr.f32.gmra.mrb[0].mxu0 %v766
        %v768 = vpop.f32.mrb[0].mxu0
        %v769 = vadd.f32 %v544, %v768
        %v770 = vpop.f32.mrb[0].mxu0
        %771 = vmatprep.mubr.f32.mxu0 0.0
        %v772 = vand.u32 %v357, 4294901760
        %773 = vmatmul.mubr.f32.gmra.mrb[0].mxu0 %v772
        %v774 = vpop.f32.mrb[0].mxu0
        %v775 = vadd.f32 %v554, %v774
        %v776 = vpop.f32.mrb[0].mxu0
        %777 = vmatprep.mubr.f32.mxu0 0.0
        %v778 = vand.u32 %v360, 4294901760
        %779 = vmatmul.mubr.f32.gmra.mrb[0].mxu0 %v778
        %v780 = vpop.f32.mrb[0].mxu0
        %v781 = vadd.f32 %v564, %v780
        %v782 = vpop.f32.mrb[0].mxu0
        %783 = vmatprep.mubr.f32.mxu0 0.0
        %v784 = vand.u32 %v363, 4294901760
        %785 = vmatmul.mubr.f32.gmra.mrb[0].mxu0 %v784
        %v786 = vpop.f32.mrb[0].mxu0
        %v787 = vadd.f32 %v574, %v786
        %v788 = vpop.f32.mrb[0].mxu0
        %789 = vmatprep.mubr.f32.mxu0 0.0
        %v790 = vand.u32 %v366, 4294901760
        %791 = vmatmul.mubr.f32.gmra.mrb[0].mxu0 %v790
        %v792 = vpop.f32.mrb[0].mxu0
        %v793 = vadd.f32 %v584, %v792
        %v794 = vpop.f32.mrb[0].mxu0
        %795 = vmatprep.mubr.f32.mxu0 0.0
        %v796 = vand.u32 %v369, 4294901760
        %797 = vmatmul.mubr.f32.gmra.mrb[0].mxu0 %v796
        %v798 = vpop.f32.mrb[0].mxu0
        %v799 = vadd.f32 %v594, %v798
        %v800 = vpop.f32.mrb[0].mxu0
        %801 = vmatprep.mubr.f32.mxu0 0.0
        %v802 = vand.u32 %v372, 4294901760
        %803 = vmatmul.mubr.f32.gmra.mrb[0].mxu0 %v802
        %v804 = vpop.f32.mrb[0].mxu0
        %v805 = vadd.f32 %v604, %v804
        %v806 = vpop.f32.mrb[0].mxu0
        %807 = vdwg.mxu0
        %808 = vmatprep.subr.mxu0 0.0
        %v809 = vand.u32 %v301, 4294901760
        %v810 = vsub.f32 %v301, %v809
        %811 = vmatpush1.msra.mxu0 %v810
        %812 = vmatprep.subr.mxu0 0.0
        %v813 = vand.u32 %v302, 4294901760
        %v814 = vsub.f32 %v302, %v813
        %815 = vmatpush1.msra.mxu0 %v814
        %816 = vmatprep.subr.mxu0 0.0
        %v817 = vand.u32 %v303, 4294901760
        %v818 = vsub.f32 %v303, %v817
        %819 = vmatpush1.msra.mxu0 %v818
        %820 = vmatprep.subr.mxu0 0.0
        %v821 = vand.u32 %v304, 4294901760
        %v822 = vsub.f32 %v304, %v821
        %823 = vmatpush1.msra.mxu0 %v822
        %824 = vmatprep.subr.mxu0 0.0
        %v825 = vand.u32 %v305, 4294901760
        %v826 = vsub.f32 %v305, %v825
        %827 = vmatpush1.msra.mxu0 %v826
        %828 = vmatprep.subr.mxu0 0.0
        %v829 = vand.u32 %v306, 4294901760
        %v830 = vsub.f32 %v306, %v829
        %831 = vmatpush1.msra.mxu0 %v830
        %832 = vmatprep.subr.mxu0 0.0
        %v833 = vand.u32 %v307, 4294901760
        %v834 = vsub.f32 %v307, %v833
        %835 = vmatpush1.msra.mxu0 %v834
        %836 = vmatprep.subr.mxu0 0.0
        %v837 = vand.u32 %v308, 4294901760
        %v838 = vsub.f32 %v308, %v837
        %839 = vmatpush1.msra.mxu0 %v838
        %840 = vmatprep.subr.mxu0 0.0
        %841 = vmatpush1.msra.mxu0 0.0
        %842 = vmatprep.subr.mxu0 0.0
        %843 = vmatpush1.msra.mxu0 0.0
        %844 = vmatprep.subr.mxu0 0.0
        %845 = vmatpush1.msra.mxu0 0.0
        %846 = vmatprep.subr.mxu0 0.0
        %847 = vmatpush1.msra.mxu0 0.0
        %848 = vmatprep.subr.mxu0 0.0
        %849 = vmatpush1.msra.mxu0 0.0
        %850 = vmatprep.subr.mxu0 0.0
        %851 = vmatpush1.msra.mxu0 0.0
        %852 = vmatprep.subr.mxu0 0.0
        %853 = vmatpush1.msra.mxu0 0.0
        %854 = vmatprep.subr.mxu0 0.0
        %855 = vmatpush1.msra.mxu0 0.0
        %856 = vmatprep.subr.mxu0 0.0
        %857 = vmatpush1.msra.mxu0 0.0
        %858 = vmatprep.subr.mxu0 0.0
        %859 = vmatpush1.msra.mxu0 0.0
        %860 = vmatprep.subr.mxu0 0.0
        %861 = vmatpush1.msra.mxu0 0.0
        %862 = vmatprep.subr.mxu0 0.0
        %863 = vmatpush1.msra.mxu0 0.0
        %864 = vmatprep.subr.mxu0 0.0
        %865 = vmatpush1.msra.mxu0 0.0
        %866 = vmatprep.subr.mxu0 0.0
        %867 = vmatpush1.msra.mxu0 0.0
        %868 = vmatprep.subr.mxu0 0.0
        %869 = vmatpush1.msra.mxu0 0.0
        %870 = vmatprep.subr.mxu0 0.0
        %871 = vmatpush1.msra.mxu0 0.0
        %872 = vmatprep.subr.mxu0 0.0
        %873 = vmatpush1.msra.mxu0 0.0
        %874 = vmatprep.subr.mxu0 0.0
        %875 = vmatpush1.msra.mxu0 0.0
        %876 = vmatprep.subr.mxu0 0.0
        %877 = vmatpush1.msra.mxu0 0.0
        %878 = vmatprep.subr.mxu0 0.0
        %879 = vmatpush1.msra.mxu0 0.0
        %880 = vmatprep.subr.mxu0 0.0
        %881 = vmatpush1.msra.mxu0 0.0
        %882 = vmatprep.subr.mxu0 0.0
        %883 = vmatpush1.msra.mxu0 0.0
        %884 = vmatprep.subr.mxu0 0.0
        %885 = vmatpush1.msra.mxu0 0.0
        %886 = vmatprep.subr.mxu0 0.0
        %887 = vmatpush1.msra.mxu0 0.0
        %888 = vmatprep.mubr.f32.mxu0 0.0
        %v889 = vand.u32 %v327, 4294901760
        %v890 = vsub.f32 %v327, %v889
        %891 = vmatmul.mubr.f32.gmra.mrb[0].mxu0 %v890
        %v892 = vpop.f32.mrb[0].mxu0
        %v893 = vadd.f32 %v715, %v892
        %v894 = vpop.f32.mrb[0].mxu0
        %895 = vmatprep.mubr.f32.mxu0 0.0
        %v896 = vand.u32 %v330, 4294901760
        %v897 = vsub.f32 %v330, %v896
        %898 = vmatmul.mubr.f32.gmra.mrb[0].mxu0 %v897
        %v899 = vpop.f32.mrb[0].mxu0
        %v900 = vadd.f32 %v721, %v899
        %v901 = vpop.f32.mrb[0].mxu0
        %902 = vmatprep.mubr.f32.mxu0 0.0
        %v903 = vand.u32 %v333, 4294901760
        %v904 = vsub.f32 %v333, %v903
        %905 = vmatmul.mubr.f32.gmra.mrb[0].mxu0 %v904
        %v906 = vpop.f32.mrb[0].mxu0
        %v907 = vadd.f32 %v727, %v906
        %v908 = vpop.f32.mrb[0].mxu0
        %909 = vmatprep.mubr.f32.mxu0 0.0
        %v910 = vand.u32 %v336, 4294901760
        %v911 = vsub.f32 %v336, %v910
        %912 = vmatmul.mubr.f32.gmra.mrb[0].mxu0 %v911
        %v913 = vpop.f32.mrb[0].mxu0
        %v914 = vadd.f32 %v733, %v913
        %v915 = vpop.f32.mrb[0].mxu0
        %916 = vmatprep.mubr.f32.mxu0 0.0
        %v917 = vand.u32 %v339, 4294901760
        %v918 = vsub.f32 %v339, %v917
        %919 = vmatmul.mubr.f32.gmra.mrb[0].mxu0 %v918
        %v920 = vpop.f32.mrb[0].mxu0
        %v921 = vadd.f32 %v739, %v920
        %v922 = vpop.f32.mrb[0].mxu0
        %923 = vmatprep.mubr.f32.mxu0 0.0
        %v924 = vand.u32 %v342, 4294901760
        %v925 = vsub.f32 %v342, %v924
        %926 = vmatmul.mubr.f32.gmra.mrb[0].mxu0 %v925
        %v927 = vpop.f32.mrb[0].mxu0
        %v928 = vadd.f32 %v745, %v927
        %v929 = vpop.f32.mrb[0].mxu0
        %930 = vmatprep.mubr.f32.mxu0 0.0
        %v931 = vand.u32 %v345, 4294901760
        %v932 = vsub.f32 %v345, %v931
        %933 = vmatmul.mubr.f32.gmra.mrb[0].mxu0 %v932
        %v934 = vpop.f32.mrb[0].mxu0
        %v935 = vadd.f32 %v751, %v934
        %v936 = vpop.f32.mrb[0].mxu0
        %937 = vmatprep.mubr.f32.mxu0 0.0
        %v938 = vand.u32 %v348, 4294901760
        %v939 = vsub.f32 %v348, %v938
        %940 = vmatmul.mubr.f32.gmra.mrb[0].mxu0 %v939
        %v941 = vpop.f32.mrb[0].mxu0
        %v942 = vadd.f32 %v757, %v941
        %v943 = vpop.f32.mrb[0].mxu0
        %944 = vmatprep.mubr.f32.mxu0 0.0
        %v945 = vand.u32 %v351, 4294901760
        %v946 = vsub.f32 %v351, %v945
        %947 = vmatmul.mubr.f32.gmra.mrb[0].mxu0 %v946
        %v948 = vpop.f32.mrb[0].mxu0
        %v949 = vadd.f32 %v763, %v948
        %v950 = vpop.f32.mrb[0].mxu0
        %951 = vmatprep.mubr.f32.mxu0 0.0
        %v952 = vand.u32 %v354, 4294901760
        %v953 = vsub.f32 %v354, %v952
        %954 = vmatmul.mubr.f32.gmra.mrb[0].mxu0 %v953
        %v955 = vpop.f32.mrb[0].mxu0
        %v956 = vadd.f32 %v769, %v955
        %v957 = vpop.f32.mrb[0].mxu0
        %958 = vmatprep.mubr.f32.mxu0 0.0
        %v959 = vand.u32 %v357, 4294901760
        %v960 = vsub.f32 %v357, %v959
        %961 = vmatmul.mubr.f32.gmra.mrb[0].mxu0 %v960
        %v962 = vpop.f32.mrb[0].mxu0
        %v963 = vadd.f32 %v775, %v962
        %v964 = vpop.f32.mrb[0].mxu0
        %965 = vmatprep.mubr.f32.mxu0 0.0
        %v966 = vand.u32 %v360, 4294901760
        %v967 = vsub.f32 %v360, %v966
        %968 = vmatmul.mubr.f32.gmra.mrb[0].mxu0 %v967
        %v969 = vpop.f32.mrb[0].mxu0
        %v970 = vadd.f32 %v781, %v969
        %v971 = vpop.f32.mrb[0].mxu0
        %972 = vmatprep.mubr.f32.mxu0 0.0
        %v973 = vand.u32 %v363, 4294901760
        %v974 = vsub.f32 %v363, %v973
        %975 = vmatmul.mubr.f32.gmra.mrb[0].mxu0 %v974
        %v976 = vpop.f32.mrb[0].mxu0
        %v977 = vadd.f32 %v787, %v976
        %v978 = vpop.f32.mrb[0].mxu0
        %979 = vmatprep.mubr.f32.mxu0 0.0
        %v980 = vand.u32 %v366, 4294901760
        %v981 = vsub.f32 %v366, %v980
        %982 = vmatmul.mubr.f32.gmra.mrb[0].mxu0 %v981
        %v983 = vpop.f32.mrb[0].mxu0
        %v984 = vadd.f32 %v793, %v983
        %v985 = vpop.f32.mrb[0].mxu0
        %986 = vmatprep.mubr.f32.mxu0 0.0
        %v987 = vand.u32 %v369, 4294901760
        %v988 = vsub.f32 %v369, %v987
        %989 = vmatmul.mubr.f32.gmra.mrb[0].mxu0 %v988
        %v990 = vpop.f32.mrb[0].mxu0
        %v991 = vadd.f32 %v799, %v990
        %v992 = vpop.f32.mrb[0].mxu0
        %993 = vmatprep.mubr.f32.mxu0 0.0
        %v994 = vand.u32 %v372, 4294901760
        %v995 = vsub.f32 %v372, %v994
        %996 = vmatmul.mubr.f32.gmra.mrb[0].mxu0 %v995
        %v997 = vpop.f32.mrb[0].mxu0
        %v998 = vadd.f32 %v805, %v997
        %v999 = vpop.f32.mrb[0].mxu0
        %1000 = vdwg.mxu0
        %1001 = vmatprep.subr.mxu0 0.0
        %v1002 = vand.u32 %v301, 4294901760
        %1003 = vmatpush1.msra.mxu0 %v1002
        %1004 = vmatprep.subr.mxu0 0.0
        %v1005 = vand.u32 %v302, 4294901760
        %1006 = vmatpush1.msra.mxu0 %v1005
        %1007 = vmatprep.subr.mxu0 0.0
        %v1008 = vand.u32 %v303, 4294901760
        %1009 = vmatpush1.msra.mxu0 %v1008
        %1010 = vmatprep.subr.mxu0 0.0
        %v1011 = vand.u32 %v304, 4294901760
        %1012 = vmatpush1.msra.mxu0 %v1011
        %1013 = vmatprep.subr.mxu0 0.0
        %v1014 = vand.u32 %v305, 4294901760
        %1015 = vmatpush1.msra.mxu0 %v1014
        %1016 = vmatprep.subr.mxu0 0.0
        %v1017 = vand.u32 %v306, 4294901760
        %1018 = vmatpush1.msra.mxu0 %v1017
        %1019 = vmatprep.subr.mxu0 0.0
        %v1020 = vand.u32 %v307, 4294901760
        %1021 = vmatpush1.msra.mxu0 %v1020
        %1022 = vmatprep.subr.mxu0 0.0
        %v1023 = vand.u32 %v308, 4294901760
        %1024 = vmatpush1.msra.mxu0 %v1023
        %1025 = vmatprep.subr.mxu0 0.0
        %1026 = vmatpush1.msra.mxu0 0.0
        %1027 = vmatprep.subr.mxu0 0.0
        %1028 = vmatpush1.msra.mxu0 0.0
        %1029 = vmatprep.subr.mxu0 0.0
        %1030 = vmatpush1.msra.mxu0 0.0
        %1031 = vmatprep.subr.mxu0 0.0
        %1032 = vmatpush1.msra.mxu0 0.0
        %1033 = vmatprep.subr.mxu0 0.0
        %1034 = vmatpush1.msra.mxu0 0.0
        %1035 = vmatprep.subr.mxu0 0.0
        %1036 = vmatpush1.msra.mxu0 0.0
        %1037 = vmatprep.subr.mxu0 0.0
        %1038 = vmatpush1.msra.mxu0 0.0
        %1039 = vmatprep.subr.mxu0 0.0
        %1040 = vmatpush1.msra.mxu0 0.0
        %1041 = vmatprep.subr.mxu0 0.0
        %1042 = vmatpush1.msra.mxu0 0.0
        %1043 = vmatprep.subr.mxu0 0.0
        %1044 = vmatpush1.msra.mxu0 0.0
        %1045 = vmatprep.subr.mxu0 0.0
        %1046 = vmatpush1.msra.mxu0 0.0
        %1047 = vmatprep.subr.mxu0 0.0
        %1048 = vmatpush1.msra.mxu0 0.0
        %1049 = vmatprep.subr.mxu0 0.0
        %1050 = vmatpush1.msra.mxu0 0.0
        %1051 = vmatprep.subr.mxu0 0.0
        %1052 = vmatpush1.msra.mxu0 0.0
        %1053 = vmatprep.subr.mxu0 0.0
        %1054 = vmatpush1.msra.mxu0 0.0
        %1055 = vmatprep.subr.mxu0 0.0
        %1056 = vmatpush1.msra.mxu0 0.0
        %1057 = vmatprep.subr.mxu0 0.0
        %1058 = vmatpush1.msra.mxu0 0.0
        %1059 = vmatprep.subr.mxu0 0.0
        %1060 = vmatpush1.msra.mxu0 0.0
        %1061 = vmatprep.subr.mxu0 0.0
        %1062 = vmatpush1.msra.mxu0 0.0
        %1063 = vmatprep.subr.mxu0 0.0
        %1064 = vmatpush1.msra.mxu0 0.0
        %1065 = vmatprep.subr.mxu0 0.0
        %1066 = vmatpush1.msra.mxu0 0.0
        %1067 = vmatprep.subr.mxu0 0.0
        %1068 = vmatpush1.msra.mxu0 0.0
        %1069 = vmatprep.subr.mxu0 0.0
        %1070 = vmatpush1.msra.mxu0 0.0
        %1071 = vmatprep.subr.mxu0 0.0
        %1072 = vmatpush1.msra.mxu0 0.0
        %1073 = vmatprep.mubr.f32.mxu0 0.0
        %v1074 = vand.u32 %v327, 4294901760
        %v1075 = vsub.f32 %v327, %v1074
        %v1076 = vand.u32 %v1075, 4294901760
        %1077 = vmatmul.mubr.f32.gmra.mrb[0].mxu0 %v1076
        %v1078 = vpop.f32.mrb[0].mxu0
        %v1079 = vadd.f32 %v893, %v1078
        %v1080 = vpop.f32.mrb[0].mxu0
        %1081 = vmatprep.mubr.f32.mxu0 0.0
        %v1082 = vand.u32 %v330, 4294901760
        %v1083 = vsub.f32 %v330, %v1082
        %v1084 = vand.u32 %v1083, 4294901760
        %1085 = vmatmul.mubr.f32.gmra.mrb[0].mxu0 %v1084
        %v1086 = vpop.f32.mrb[0].mxu0
        %v1087 = vadd.f32 %v900, %v1086
        %v1088 = vpop.f32.mrb[0].mxu0
        %1089 = vmatprep.mubr.f32.mxu0 0.0
        %v1090 = vand.u32 %v333, 4294901760
        %v1091 = vsub.f32 %v333, %v1090
        %v1092 = vand.u32 %v1091, 4294901760
        %1093 = vmatmul.mubr.f32.gmra.mrb[0].mxu0 %v1092
        %v1094 = vpop.f32.mrb[0].mxu0
        %v1095 = vadd.f32 %v907, %v1094
        %v1096 = vpop.f32.mrb[0].mxu0
        %1097 = vmatprep.mubr.f32.mxu0 0.0
        %v1098 = vand.u32 %v336, 4294901760
        %v1099 = vsub.f32 %v336, %v1098
        %v1100 = vand.u32 %v1099, 4294901760
        %1101 = vmatmul.mubr.f32.gmra.mrb[0].mxu0 %v1100
        %v1102 = vpop.f32.mrb[0].mxu0
        %v1103 = vadd.f32 %v914, %v1102
        %v1104 = vpop.f32.mrb[0].mxu0
        %1105 = vmatprep.mubr.f32.mxu0 0.0
        %v1106 = vand.u32 %v339, 4294901760
        %v1107 = vsub.f32 %v339, %v1106
        %v1108 = vand.u32 %v1107, 4294901760
        %1109 = vmatmul.mubr.f32.gmra.mrb[0].mxu0 %v1108
        %v1110 = vpop.f32.mrb[0].mxu0
        %v1111 = vadd.f32 %v921, %v1110
        %v1112 = vpop.f32.mrb[0].mxu0
        %1113 = vmatprep.mubr.f32.mxu0 0.0
        %v1114 = vand.u32 %v342, 4294901760
        %v1115 = vsub.f32 %v342, %v1114
        %v1116 = vand.u32 %v1115, 4294901760
        %1117 = vmatmul.mubr.f32.gmra.mrb[0].mxu0 %v1116
        %v1118 = vpop.f32.mrb[0].mxu0
        %v1119 = vadd.f32 %v928, %v1118
        %v1120 = vpop.f32.mrb[0].mxu0
        %1121 = vmatprep.mubr.f32.mxu0 0.0
        %v1122 = vand.u32 %v345, 4294901760
        %v1123 = vsub.f32 %v345, %v1122
        %v1124 = vand.u32 %v1123, 4294901760
        %1125 = vmatmul.mubr.f32.gmra.mrb[0].mxu0 %v1124
        %v1126 = vpop.f32.mrb[0].mxu0
        %v1127 = vadd.f32 %v935, %v1126
        %v1128 = vpop.f32.mrb[0].mxu0
        %1129 = vmatprep.mubr.f32.mxu0 0.0
        %v1130 = vand.u32 %v348, 4294901760
        %v1131 = vsub.f32 %v348, %v1130
        %v1132 = vand.u32 %v1131, 4294901760
        %1133 = vmatmul.mubr.f32.gmra.mrb[0].mxu0 %v1132
        %v1134 = vpop.f32.mrb[0].mxu0
        %v1135 = vadd.f32 %v942, %v1134
        %v1136 = vpop.f32.mrb[0].mxu0
        %1137 = vmatprep.mubr.f32.mxu0 0.0
        %v1138 = vand.u32 %v351, 4294901760
        %v1139 = vsub.f32 %v351, %v1138
        %v1140 = vand.u32 %v1139, 4294901760
        %1141 = vmatmul.mubr.f32.gmra.mrb[0].mxu0 %v1140
        %v1142 = vpop.f32.mrb[0].mxu0
        %v1143 = vadd.f32 %v949, %v1142
        %v1144 = vpop.f32.mrb[0].mxu0
        %1145 = vmatprep.mubr.f32.mxu0 0.0
        %v1146 = vand.u32 %v354, 4294901760
        %v1147 = vsub.f32 %v354, %v1146
        %v1148 = vand.u32 %v1147, 4294901760
        %1149 = vmatmul.mubr.f32.gmra.mrb[0].mxu0 %v1148
        %v1150 = vpop.f32.mrb[0].mxu0
        %v1151 = vadd.f32 %v956, %v1150
        %v1152 = vpop.f32.mrb[0].mxu0
        %1153 = vmatprep.mubr.f32.mxu0 0.0
        %v1154 = vand.u32 %v357, 4294901760
        %v1155 = vsub.f32 %v357, %v1154
        %v1156 = vand.u32 %v1155, 4294901760
        %1157 = vmatmul.mubr.f32.gmra.mrb[0].mxu0 %v1156
        %v1158 = vpop.f32.mrb[0].mxu0
        %v1159 = vadd.f32 %v963, %v1158
        %v1160 = vpop.f32.mrb[0].mxu0
        %1161 = vmatprep.mubr.f32.mxu0 0.0
        %v1162 = vand.u32 %v360, 4294901760
        %v1163 = vsub.f32 %v360, %v1162
        %v1164 = vand.u32 %v1163, 4294901760
        %1165 = vmatmul.mubr.f32.gmra.mrb[0].mxu0 %v1164
        %v1166 = vpop.f32.mrb[0].mxu0
        %v1167 = vadd.f32 %v970, %v1166
        %v1168 = vpop.f32.mrb[0].mxu0
        %1169 = vmatprep.mubr.f32.mxu0 0.0
        %v1170 = vand.u32 %v363, 4294901760
        %v1171 = vsub.f32 %v363, %v1170
        %v1172 = vand.u32 %v1171, 4294901760
        %1173 = vmatmul.mubr.f32.gmra.mrb[0].mxu0 %v1172
        %v1174 = vpop.f32.mrb[0].mxu0
        %v1175 = vadd.f32 %v977, %v1174
        %v1176 = vpop.f32.mrb[0].mxu0
        %1177 = vmatprep.mubr.f32.mxu0 0.0
        %v1178 = vand.u32 %v366, 4294901760
        %v1179 = vsub.f32 %v366, %v1178
        %v1180 = vand.u32 %v1179, 4294901760
        %1181 = vmatmul.mubr.f32.gmra.mrb[0].mxu0 %v1180
        %v1182 = vpop.f32.mrb[0].mxu0
        %v1183 = vadd.f32 %v984, %v1182
        %v1184 = vpop.f32.mrb[0].mxu0
        %1185 = vmatprep.mubr.f32.mxu0 0.0
        %v1186 = vand.u32 %v369, 4294901760
        %v1187 = vsub.f32 %v369, %v1186
        %v1188 = vand.u32 %v1187, 4294901760
        %1189 = vmatmul.mubr.f32.gmra.mrb[0].mxu0 %v1188
        %v1190 = vpop.f32.mrb[0].mxu0
        %v1191 = vadd.f32 %v991, %v1190
        %v1192 = vpop.f32.mrb[0].mxu0
        %1193 = vmatprep.mubr.f32.mxu0 0.0
        %v1194 = vand.u32 %v372, 4294901760
        %v1195 = vsub.f32 %v372, %v1194
        %v1196 = vand.u32 %v1195, 4294901760
        %1197 = vmatmul.mubr.f32.gmra.mrb[0].mxu0 %v1196
        %v1198 = vpop.f32.mrb[0].mxu0
        %v1199 = vadd.f32 %v998, %v1198
        %v1200 = vpop.f32.mrb[0].mxu0
        %1201 = vdwg.mxu0
        %1202 = vmatprep.subr.mxu0 0.0
        %v1203 = vand.u32 %v301, 4294901760
        %v1204 = vsub.f32 %v301, %v1203
        %v1205 = vand.u32 %v1204, 4294901760
        %1206 = vmatpush1.msra.mxu0 %v1205
        %1207 = vmatprep.subr.mxu0 0.0
        %v1208 = vand.u32 %v302, 4294901760
        %v1209 = vsub.f32 %v302, %v1208
        %v1210 = vand.u32 %v1209, 4294901760
        %1211 = vmatpush1.msra.mxu0 %v1210
        %1212 = vmatprep.subr.mxu0 0.0
        %v1213 = vand.u32 %v303, 4294901760
        %v1214 = vsub.f32 %v303, %v1213
        %v1215 = vand.u32 %v1214, 4294901760
        %1216 = vmatpush1.msra.mxu0 %v1215
        %1217 = vmatprep.subr.mxu0 0.0
        %v1218 = vand.u32 %v304, 4294901760
        %v1219 = vsub.f32 %v304, %v1218
        %v1220 = vand.u32 %v1219, 4294901760
        %1221 = vmatpush1.msra.mxu0 %v1220
        %1222 = vmatprep.subr.mxu0 0.0
        %v1223 = vand.u32 %v305, 4294901760
        %v1224 = vsub.f32 %v305, %v1223
        %v1225 = vand.u32 %v1224, 4294901760
        %1226 = vmatpush1.msra.mxu0 %v1225
        %1227 = vmatprep.subr.mxu0 0.0
        %v1228 = vand.u32 %v306, 4294901760
        %v1229 = vsub.f32 %v306, %v1228
        %v1230 = vand.u32 %v1229, 4294901760
        %1231 = vmatpush1.msra.mxu0 %v1230
        %1232 = vmatprep.subr.mxu0 0.0
        %v1233 = vand.u32 %v307, 4294901760
        %v1234 = vsub.f32 %v307, %v1233
        %v1235 = vand.u32 %v1234, 4294901760
        %1236 = vmatpush1.msra.mxu0 %v1235
        %1237 = vmatprep.subr.mxu0 0.0
        %v1238 = vand.u32 %v308, 4294901760
        %v1239 = vsub.f32 %v308, %v1238
        %v1240 = vand.u32 %v1239, 4294901760
        %1241 = vmatpush1.msra.mxu0 %v1240
        %1242 = vmatprep.subr.mxu0 0.0
        %1243 = vmatpush1.msra.mxu0 0.0
        %1244 = vmatprep.subr.mxu0 0.0
        %1245 = vmatpush1.msra.mxu0 0.0
        %1246 = vmatprep.subr.mxu0 0.0
        %1247 = vmatpush1.msra.mxu0 0.0
        %1248 = vmatprep.subr.mxu0 0.0
        %1249 = vmatpush1.msra.mxu0 0.0
        %1250 = vmatprep.subr.mxu0 0.0
        %1251 = vmatpush1.msra.mxu0 0.0
        %1252 = vmatprep.subr.mxu0 0.0
        %1253 = vmatpush1.msra.mxu0 0.0
        %1254 = vmatprep.subr.mxu0 0.0
        %1255 = vmatpush1.msra.mxu0 0.0
        %1256 = vmatprep.subr.mxu0 0.0
        %1257 = vmatpush1.msra.mxu0 0.0
        %1258 = vmatprep.subr.mxu0 0.0
        %1259 = vmatpush1.msra.mxu0 0.0
        %1260 = vmatprep.subr.mxu0 0.0
        %1261 = vmatpush1.msra.mxu0 0.0
        %1262 = vmatprep.subr.mxu0 0.0
        %1263 = vmatpush1.msra.mxu0 0.0
        %1264 = vmatprep.subr.mxu0 0.0
        %1265 = vmatpush1.msra.mxu0 0.0
        %1266 = vmatprep.subr.mxu0 0.0
        %1267 = vmatpush1.msra.mxu0 0.0
        %1268 = vmatprep.subr.mxu0 0.0
        %1269 = vmatpush1.msra.mxu0 0.0
        %1270 = vmatprep.subr.mxu0 0.0
        %1271 = vmatpush1.msra.mxu0 0.0
        %1272 = vmatprep.subr.mxu0 0.0
        %1273 = vmatpush1.msra.mxu0 0.0
        %1274 = vmatprep.subr.mxu0 0.0
        %1275 = vmatpush1.msra.mxu0 0.0
        %1276 = vmatprep.subr.mxu0 0.0
        %1277 = vmatpush1.msra.mxu0 0.0
        %1278 = vmatprep.subr.mxu0 0.0
        %1279 = vmatpush1.msra.mxu0 0.0
        %1280 = vmatprep.subr.mxu0 0.0
        %1281 = vmatpush1.msra.mxu0 0.0
        %1282 = vmatprep.subr.mxu0 0.0
        %1283 = vmatpush1.msra.mxu0 0.0
        %1284 = vmatprep.subr.mxu0 0.0
        %1285 = vmatpush1.msra.mxu0 0.0
        %1286 = vmatprep.subr.mxu0 0.0
        %1287 = vmatpush1.msra.mxu0 0.0
        %1288 = vmatprep.subr.mxu0 0.0
        %1289 = vmatpush1.msra.mxu0 0.0
        %1290 = vmatprep.mubr.f32.mxu0 0.0
        %v1291 = vand.u32 %v327, 4294901760
        %1292 = vmatmul.mubr.f32.gmra.mrb[0].mxu0 %v1291
        %v1293 = vpop.f32.mrb[0].mxu0
        %v1294 = vadd.f32 %v1079, %v1293
        %v1295 = vpop.f32.mrb[0].mxu0
        %1296 = vmatprep.mubr.f32.mxu0 0.0
        %v1297 = vand.u32 %v330, 4294901760
        %1298 = vmatmul.mubr.f32.gmra.mrb[0].mxu0 %v1297
        %v1299 = vpop.f32.mrb[0].mxu0
        %v1300 = vadd.f32 %v1087, %v1299
        %v1301 = vpop.f32.mrb[0].mxu0
        %1302 = vmatprep.mubr.f32.mxu0 0.0
        %v1303 = vand.u32 %v333, 4294901760
        %1304 = vmatmul.mubr.f32.gmra.mrb[0].mxu0 %v1303
        %v1305 = vpop.f32.mrb[0].mxu0
        %v1306 = vadd.f32 %v1095, %v1305
        %v1307 = vpop.f32.mrb[0].mxu0
        %1308 = vmatprep.mubr.f32.mxu0 0.0
        %v1309 = vand.u32 %v336, 4294901760
        %1310 = vmatmul.mubr.f32.gmra.mrb[0].mxu0 %v1309
        %v1311 = vpop.f32.mrb[0].mxu0
        %v1312 = vadd.f32 %v1103, %v1311
        %v1313 = vpop.f32.mrb[0].mxu0
        %1314 = vmatprep.mubr.f32.mxu0 0.0
        %v1315 = vand.u32 %v339, 4294901760
        %1316 = vmatmul.mubr.f32.gmra.mrb[0].mxu0 %v1315
        %v1317 = vpop.f32.mrb[0].mxu0
        %v1318 = vadd.f32 %v1111, %v1317
        %v1319 = vpop.f32.mrb[0].mxu0
        %1320 = vmatprep.mubr.f32.mxu0 0.0
        %v1321 = vand.u32 %v342, 4294901760
        %1322 = vmatmul.mubr.f32.gmra.mrb[0].mxu0 %v1321
        %v1323 = vpop.f32.mrb[0].mxu0
        %v1324 = vadd.f32 %v1119, %v1323
        %v1325 = vpop.f32.mrb[0].mxu0
        %1326 = vmatprep.mubr.f32.mxu0 0.0
        %v1327 = vand.u32 %v345, 4294901760
        %1328 = vmatmul.mubr.f32.gmra.mrb[0].mxu0 %v1327
        %v1329 = vpop.f32.mrb[0].mxu0
        %v1330 = vadd.f32 %v1127, %v1329
        %v1331 = vpop.f32.mrb[0].mxu0
        %1332 = vmatprep.mubr.f32.mxu0 0.0
        %v1333 = vand.u32 %v348, 4294901760
        %1334 = vmatmul.mubr.f32.gmra.mrb[0].mxu0 %v1333
        %v1335 = vpop.f32.mrb[0].mxu0
        %v1336 = vadd.f32 %v1135, %v1335
        %v1337 = vpop.f32.mrb[0].mxu0
        %1338 = vmatprep.mubr.f32.mxu0 0.0
        %v1339 = vand.u32 %v351, 4294901760
        %1340 = vmatmul.mubr.f32.gmra.mrb[0].mxu0 %v1339
        %v1341 = vpop.f32.mrb[0].mxu0
        %v1342 = vadd.f32 %v1143, %v1341
        %v1343 = vpop.f32.mrb[0].mxu0
        %1344 = vmatprep.mubr.f32.mxu0 0.0
        %v1345 = vand.u32 %v354, 4294901760
        %1346 = vmatmul.mubr.f32.gmra.mrb[0].mxu0 %v1345
        %v1347 = vpop.f32.mrb[0].mxu0
        %v1348 = vadd.f32 %v1151, %v1347
        %v1349 = vpop.f32.mrb[0].mxu0
        %1350 = vmatprep.mubr.f32.mxu0 0.0
        %v1351 = vand.u32 %v357, 4294901760
        %1352 = vmatmul.mubr.f32.gmra.mrb[0].mxu0 %v1351
        %v1353 = vpop.f32.mrb[0].mxu0
        %v1354 = vadd.f32 %v1159, %v1353
        %v1355 = vpop.f32.mrb[0].mxu0
        %1356 = vmatprep.mubr.f32.mxu0 0.0
        %v1357 = vand.u32 %v360, 4294901760
        %1358 = vmatmul.mubr.f32.gmra.mrb[0].mxu0 %v1357
        %v1359 = vpop.f32.mrb[0].mxu0
        %v1360 = vadd.f32 %v1167, %v1359
        %v1361 = vpop.f32.mrb[0].mxu0
        %1362 = vmatprep.mubr.f32.mxu0 0.0
        %v1363 = vand.u32 %v363, 4294901760
        %1364 = vmatmul.mubr.f32.gmra.mrb[0].mxu0 %v1363
        %v1365 = vpop.f32.mrb[0].mxu0
        %v1366 = vadd.f32 %v1175, %v1365
        %v1367 = vpop.f32.mrb[0].mxu0
        %1368 = vmatprep.mubr.f32.mxu0 0.0
        %v1369 = vand.u32 %v366, 4294901760
        %1370 = vmatmul.mubr.f32.gmra.mrb[0].mxu0 %v1369
        %v1371 = vpop.f32.mrb[0].mxu0
        %v1372 = vadd.f32 %v1183, %v1371
        %v1373 = vpop.f32.mrb[0].mxu0
        %1374 = vmatprep.mubr.f32.mxu0 0.0
        %v1375 = vand.u32 %v369, 4294901760
        %1376 = vmatmul.mubr.f32.gmra.mrb[0].mxu0 %v1375
        %v1377 = vpop.f32.mrb[0].mxu0
        %v1378 = vadd.f32 %v1191, %v1377
        %v1379 = vpop.f32.mrb[0].mxu0
        %1380 = vmatprep.mubr.f32.mxu0 0.0
        %v1381 = vand.u32 %v372, 4294901760
        %1382 = vmatmul.mubr.f32.gmra.mrb[0].mxu0 %v1381
        %v1383 = vpop.f32.mrb[0].mxu0
        %v1384 = vadd.f32 %v1199, %v1383
        %v1385 = vpop.f32.mrb[0].mxu0
        %1386 = vdwg.mxu0
        %1387 = vmatprep.subr.mxu0 0.0
        %v1388 = vand.u32 %v301, 4294901760
        %1389 = vmatpush1.msra.mxu0 %v1388
        %1390 = vmatprep.subr.mxu0 0.0
        %v1391 = vand.u32 %v302, 4294901760
        %1392 = vmatpush1.msra.mxu0 %v1391
        %1393 = vmatprep.subr.mxu0 0.0
        %v1394 = vand.u32 %v303, 4294901760
        %1395 = vmatpush1.msra.mxu0 %v1394
        %1396 = vmatprep.subr.mxu0 0.0
        %v1397 = vand.u32 %v304, 4294901760
        %1398 = vmatpush1.msra.mxu0 %v1397
        %1399 = vmatprep.subr.mxu0 0.0
        %v1400 = vand.u32 %v305, 4294901760
        %1401 = vmatpush1.msra.mxu0 %v1400
        %1402 = vmatprep.subr.mxu0 0.0
        %v1403 = vand.u32 %v306, 4294901760
        %1404 = vmatpush1.msra.mxu0 %v1403
        %1405 = vmatprep.subr.mxu0 0.0
        %v1406 = vand.u32 %v307, 4294901760
        %1407 = vmatpush1.msra.mxu0 %v1406
        %1408 = vmatprep.subr.mxu0 0.0
        %v1409 = vand.u32 %v308, 4294901760
        %1410 = vmatpush1.msra.mxu0 %v1409
        %1411 = vmatprep.subr.mxu0 0.0
        %1412 = vmatpush1.msra.mxu0 0.0
        %1413 = vmatprep.subr.mxu0 0.0
        %1414 = vmatpush1.msra.mxu0 0.0
        %1415 = vmatprep.subr.mxu0 0.0
        %1416 = vmatpush1.msra.mxu0 0.0
        %1417 = vmatprep.subr.mxu0 0.0
        %1418 = vmatpush1.msra.mxu0 0.0
        %1419 = vmatprep.subr.mxu0 0.0
        %1420 = vmatpush1.msra.mxu0 0.0
        %1421 = vmatprep.subr.mxu0 0.0
        %1422 = vmatpush1.msra.mxu0 0.0
        %1423 = vmatprep.subr.mxu0 0.0
        %1424 = vmatpush1.msra.mxu0 0.0
        %1425 = vmatprep.subr.mxu0 0.0
        %1426 = vmatpush1.msra.mxu0 0.0
        %1427 = vmatprep.subr.mxu0 0.0
        %1428 = vmatpush1.msra.mxu0 0.0
        %1429 = vmatprep.subr.mxu0 0.0
        %1430 = vmatpush1.msra.mxu0 0.0
        %1431 = vmatprep.subr.mxu0 0.0
        %1432 = vmatpush1.msra.mxu0 0.0
        %1433 = vmatprep.subr.mxu0 0.0
        %1434 = vmatpush1.msra.mxu0 0.0
        %1435 = vmatprep.subr.mxu0 0.0
        %1436 = vmatpush1.msra.mxu0 0.0
        %1437 = vmatprep.subr.mxu0 0.0
        %1438 = vmatpush1.msra.mxu0 0.0
        %1439 = vmatprep.subr.mxu0 0.0
        %1440 = vmatpush1.msra.mxu0 0.0
        %1441 = vmatprep.subr.mxu0 0.0
        %1442 = vmatpush1.msra.mxu0 0.0
        %1443 = vmatprep.subr.mxu0 0.0
        %1444 = vmatpush1.msra.mxu0 0.0
        %1445 = vmatprep.subr.mxu0 0.0
        %1446 = vmatpush1.msra.mxu0 0.0
        %1447 = vmatprep.subr.mxu0 0.0
        %1448 = vmatpush1.msra.mxu0 0.0
        %1449 = vmatprep.subr.mxu0 0.0
        %1450 = vmatpush1.msra.mxu0 0.0
        %1451 = vmatprep.subr.mxu0 0.0
        %1452 = vmatpush1.msra.mxu0 0.0
        %1453 = vmatprep.subr.mxu0 0.0
        %1454 = vmatpush1.msra.mxu0 0.0
        %1455 = vmatprep.subr.mxu0 0.0
        %1456 = vmatpush1.msra.mxu0 0.0
        %1457 = vmatprep.subr.mxu0 0.0
        %1458 = vmatpush1.msra.mxu0 0.0
        %1459 = vmatprep.mubr.f32.mxu0 0.0
        %v1460 = vand.u32 %v327, 4294901760
        %1461 = vmatmul.mubr.f32.gmra.mrb[0].mxu0 %v1460
        %v1462 = vpop.f32.mrb[0].mxu0
        %v1463 = vadd.f32 %v1294, %v1462
        %v1464 = vpop.f32.mrb[0].mxu0
        %1465 = vmatprep.mubr.f32.mxu0 0.0
        %v1466 = vand.u32 %v330, 4294901760
        %1467 = vmatmul.mubr.f32.gmra.mrb[0].mxu0 %v1466
        %v1468 = vpop.f32.mrb[0].mxu0
        %v1469 = vadd.f32 %v1300, %v1468
        %v1470 = vpop.f32.mrb[0].mxu0
        %1471 = vmatprep.mubr.f32.mxu0 0.0
        %v1472 = vand.u32 %v333, 4294901760
        %1473 = vmatmul.mubr.f32.gmra.mrb[0].mxu0 %v1472
        %v1474 = vpop.f32.mrb[0].mxu0
        %v1475 = vadd.f32 %v1306, %v1474
        %v1476 = vpop.f32.mrb[0].mxu0
        %1477 = vmatprep.mubr.f32.mxu0 0.0
        %v1478 = vand.u32 %v336, 4294901760
        %1479 = vmatmul.mubr.f32.gmra.mrb[0].mxu0 %v1478
        %v1480 = vpop.f32.mrb[0].mxu0
        %v1481 = vadd.f32 %v1312, %v1480
        %v1482 = vpop.f32.mrb[0].mxu0
        %1483 = vmatprep.mubr.f32.mxu0 0.0
        %v1484 = vand.u32 %v339, 4294901760
        %1485 = vmatmul.mubr.f32.gmra.mrb[0].mxu0 %v1484
        %v1486 = vpop.f32.mrb[0].mxu0
        %v1487 = vadd.f32 %v1318, %v1486
        %v1488 = vpop.f32.mrb[0].mxu0
        %1489 = vmatprep.mubr.f32.mxu0 0.0
        %v1490 = vand.u32 %v342, 4294901760
        %1491 = vmatmul.mubr.f32.gmra.mrb[0].mxu0 %v1490
        %v1492 = vpop.f32.mrb[0].mxu0
        %v1493 = vadd.f32 %v1324, %v1492
        %v1494 = vpop.f32.mrb[0].mxu0
        %1495 = vmatprep.mubr.f32.mxu0 0.0
        %v1496 = vand.u32 %v345, 4294901760
        %1497 = vmatmul.mubr.f32.gmra.mrb[0].mxu0 %v1496
        %v1498 = vpop.f32.mrb[0].mxu0
        %v1499 = vadd.f32 %v1330, %v1498
        %v1500 = vpop.f32.mrb[0].mxu0
        %1501 = vmatprep.mubr.f32.mxu0 0.0
        %v1502 = vand.u32 %v348, 4294901760
        %1503 = vmatmul.mubr.f32.gmra.mrb[0].mxu0 %v1502
        %v1504 = vpop.f32.mrb[0].mxu0
        %v1505 = vadd.f32 %v1336, %v1504
        %v1506 = vpop.f32.mrb[0].mxu0
        %1507 = vmatprep.mubr.f32.mxu0 0.0
        %v1508 = vand.u32 %v351, 4294901760
        %1509 = vmatmul.mubr.f32.gmra.mrb[0].mxu0 %v1508
        %v1510 = vpop.f32.mrb[0].mxu0
        %v1511 = vadd.f32 %v1342, %v1510
        %v1512 = vpop.f32.mrb[0].mxu0
        %1513 = vmatprep.mubr.f32.mxu0 0.0
        %v1514 = vand.u32 %v354, 4294901760
        %1515 = vmatmul.mubr.f32.gmra.mrb[0].mxu0 %v1514
        %v1516 = vpop.f32.mrb[0].mxu0
        %v1517 = vadd.f32 %v1348, %v1516
        %v1518 = vpop.f32.mrb[0].mxu0
        %1519 = vmatprep.mubr.f32.mxu0 0.0
        %v1520 = vand.u32 %v357, 4294901760
        %1521 = vmatmul.mubr.f32.gmra.mrb[0].mxu0 %v1520
        %v1522 = vpop.f32.mrb[0].mxu0
        %v1523 = vadd.f32 %v1354, %v1522
        %v1524 = vpop.f32.mrb[0].mxu0
        %1525 = vmatprep.mubr.f32.mxu0 0.0
        %v1526 = vand.u32 %v360, 4294901760
        %1527 = vmatmul.mubr.f32.gmra.mrb[0].mxu0 %v1526
        %v1528 = vpop.f32.mrb[0].mxu0
        %v1529 = vadd.f32 %v1360, %v1528
        %v1530 = vpop.f32.mrb[0].mxu0
        %1531 = vmatprep.mubr.f32.mxu0 0.0
        %v1532 = vand.u32 %v363, 4294901760
        %1533 = vmatmul.mubr.f32.gmra.mrb[0].mxu0 %v1532
        %v1534 = vpop.f32.mrb[0].mxu0
        %v1535 = vadd.f32 %v1366, %v1534
        %v1536 = vpop.f32.mrb[0].mxu0
        %1537 = vmatprep.mubr.f32.mxu0 0.0
        %v1538 = vand.u32 %v366, 4294901760
        %1539 = vmatmul.mubr.f32.gmra.mrb[0].mxu0 %v1538
        %v1540 = vpop.f32.mrb[0].mxu0
        %v1541 = vadd.f32 %v1372, %v1540
        %v1542 = vpop.f32.mrb[0].mxu0
        %1543 = vmatprep.mubr.f32.mxu0 0.0
        %v1544 = vand.u32 %v369, 4294901760
        %1545 = vmatmul.mubr.f32.gmra.mrb[0].mxu0 %v1544
        %v1546 = vpop.f32.mrb[0].mxu0
        %v1547 = vadd.f32 %v1378, %v1546
        %v1548 = vpop.f32.mrb[0].mxu0
        %1549 = vmatprep.mubr.f32.mxu0 0.0
        %v1550 = vand.u32 %v372, 4294901760
        %1551 = vmatmul.mubr.f32.gmra.mrb[0].mxu0 %v1550
        %v1552 = vpop.f32.mrb[0].mxu0
        %v1553 = vadd.f32 %v1384, %v1552
        %v1554 = vpop.f32.mrb[0].mxu0
        %1555 = vdwg.mxu0
        %v1556 = vadd.f32 %v309, %v1463
        %v1557 = vadd.f32 %v310, %v1469
        %v1558 = vadd.f32 %v311, %v1475
        %v1559 = vadd.f32 %v312, %v1481
        %v1560 = vadd.f32 %v313, %v1487
        %v1561 = vadd.f32 %v314, %v1493
        %v1562 = vadd.f32 %v315, %v1499
        %v1563 = vadd.f32 %v316, %v1505
        %v1564 = vadd.f32 %v317, %v1511
        %v1565 = vadd.f32 %v318, %v1517
        %v1566 = vadd.f32 %v319, %v1523
        %v1567 = vadd.f32 %v320, %v1529
        %v1568 = vadd.f32 %v321, %v1535
        %v1569 = vadd.f32 %v322, %v1541
        %v1570 = vadd.f32 %v323, %v1547
        %v1571 = vadd.f32 %v324, %v1553
        %1572 = vst [vmem:[%s253] sm:$0xff] %v1556
        %1573 = vst [vmem:[%s253 + $0x8] sm:$0xff] %v1557
        %1574 = vst [vmem:[%s253 + $0x10] sm:$0xff] %v1558
        %1575 = vst [vmem:[%s253 + $0x18] sm:$0xff] %v1559
        %1576 = vst [vmem:[%s253 + $0x20] sm:$0xff] %v1560
        %1577 = vst [vmem:[%s253 + $0x28] sm:$0xff] %v1561
        %1578 = vst [vmem:[%s253 + $0x30] sm:$0xff] %v1562
        %1579 = vst [vmem:[%s253 + $0x38] sm:$0xff] %v1563
        %1580 = vst [vmem:[%s253 + $0x40] sm:$0xff] %v1564
        %1581 = vst [vmem:[%s253 + $0x48] sm:$0xff] %v1565
        %1582 = vst [vmem:[%s253 + $0x50] sm:$0xff] %v1566
        %1583 = vst [vmem:[%s253 + $0x58] sm:$0xff] %v1567
        %1584 = vst [vmem:[%s253 + $0x60] sm:$0xff] %v1568
        %1585 = vst [vmem:[%s253 + $0x68] sm:$0xff] %v1569
        %1586 = vst [vmem:[%s253 + $0x70] sm:$0xff] %v1570
        %1587 = vst [vmem:[%s253 + $0x78] sm:$0xff] %v1571
        %s1588 = sand.u32 %s101, 1
        %s1589 = scalar_lea.sflag [#allocation4], %s1588
        %s1590 = sand.u32 %s101, 1
        %s1591 = smul.addr %s1590, 128
        %s1592 = scalar_lea.vmem [#allocation3], %s1591
        // Predicated region
        $region71: #{tpu_custom_call.1} parent=61 // pred_check
          %p1593 = pneg %p111
        $region72: #{tpu_custom_call.1} parent=61 // pred_check_branch
          %1595 = sbr.rel (%p1593) target = $region74
        $region73: #{tpu_custom_call.1} parent=61 // pred_region
          %s1596 = smul.u32 16, %s21
          %s1598 = ssub.s32 2048, 2048
          %1599 = vsyncadd %s1589, %s1598
          %s1600 = smul.addr %s1596, 2
          %s1601 = sadd.s32 %s22, %s1600
          %s1602 = smul.addr %s1601, 128
          %s1603 = scalar_lea.hbm %s2, %s1602
          %s1604 = sshll.u32 %s1592, 4
          %s1605 = int_to_ptr.vmem [resolvable:$true] %s1604
          %1610 = dma.vmem_to_hbm [thread:$0]  %s1605, 2048, %s1603, %s1589, 128, 256, 8
        $region74: #{tpu_custom_call.1} parent=61 // pred_fallthru
          _
      $region62: #{tpu_custom_call.1} parent=5 // pred_fallthru
        _
      %p1611 = scmp.le.s32.totalorder 2, %s11
      // Predicated region
      $region75: #{tpu_custom_call.1} parent=5 // pred_check
        %p1612 = pneg %p1611
      $region76: #{tpu_custom_call.1} parent=5 // pred_check_branch
        %1614 = sbr.rel (%p1612) target = $region78
      $region77: #{tpu_custom_call.1} parent=5 // pred_region
        %s1615 = ssub.s32 %s11, 2
        // Predicated region
        $region79: #{tpu_custom_call.1} parent=77 // pred_check
          %p1616 = pneg %p117
        $region80: #{tpu_custom_call.1} parent=77 // pred_check_branch
          %1618 = sbr.rel (%p1616) target = $region82
        $region81: #{tpu_custom_call.1} parent=77 // pred_region
          %s1619 = sand.u32 %s102, 1
          %s1620 = scalar_lea.sflag [#allocation4], %s1619
          %s1621 = sand.u32 %s102, 1
          %s1622 = smul.addr %s1621, 128
          %s1623 = scalar_lea.vmem [#allocation3], %s1622
          %1624 = dma.done %s1620, 2048
        $region82: #{tpu_custom_call.1} parent=77 // pred_fallthru
          _
      $region78: #{tpu_custom_call.1} parent=5 // pred_fallthru
        _
    $region6: #{tpu_custom_call.1} parent=1 // loop_footer
      %s15 = sadd.s32 1, %s11
    $region7: #{tpu_custom_call.1} parent=1 // loop_footer_branch
      %10 = sbr.rel target = $region3
    $region8: #{tpu_custom_call.1} parent=1 // loop_exit
      _
    %1625 = vsyncpa [#allocation4], 1
    %s1626 = scalar_lea.sflag [#allocation4], 1
    %1627 = vsyncpa %s1626, 1

</llo_original>
